<compile_context>
chip_gen: v7x
topology: tpu7x:2x2x1
jax: 0.10.0
libtpu: 0.0.40
codegen_flags: <defaults>
</compile_context>

<pallas_src>
import jax
import jax.numpy as jnp
from jax.experimental import pallas as pl
from jax.experimental.pallas import tpu as pltpu

NEG_SLOPE = 0.01    # nn.LeakyReLU default
BN_EPS = 1e-5       # nn.BatchNorm1d default
HPAD = 128          # all hidden / output widths padded to one lane-dense width
F_IN = 768          # input feature width
MAX_TB = 1024       # upper bound on the batch tile (VMEM-safe on all chips)


def _leaky_relu(v):
    # 0 < slope < 1  =>  leaky_relu(v) == max(v, slope*v): drops the select.
    return jnp.maximum(v, NEG_SLOPE * v)


def mlp_kernel(x_ref, w0_ref, w1_ref, w2_ref, w3_ref, b_ref, o_ref):
    # bf16 MXU operands, f32 accumulation; elementwise math in f32 (v5e-safe).
    h = jnp.dot(x_ref[...].astype(jnp.bfloat16), w0_ref[...],
                preferred_element_type=jnp.float32) + b_ref[0:1, :]
    h = _leaky_relu(h).astype(jnp.bfloat16)

    h = jnp.dot(h, w1_ref[...], preferred_element_type=jnp.float32) + b_ref[1:2, :]
    h = _leaky_relu(h).astype(jnp.bfloat16)

    h = jnp.dot(h, w2_ref[...], preferred_element_type=jnp.float32) + b_ref[2:3, :]
    h = _leaky_relu(h).astype(jnp.bfloat16)

    y = jnp.dot(h, w3_ref[...], preferred_element_type=jnp.float32) + b_ref[3:4, :]
    # Only column 0 is the real scalar output; store just that column.
    o_ref[...] = jnp.clip(y[:, 0:1], 0.0, 10.0)


def _pick_tile(B):
    """Batch tile: <= MAX_TB, multiple of 128, and >= 2 grid steps when possible."""
    b128 = pl.cdiv(B, 128) * 128
    tb = max(128, min(MAX_TB, (b128 // 2 // 128) * 128))
    b_pad = pl.cdiv(B, tb) * tb
    return tb, b_pad


def net_forward(x, fp):
    """Full Net forward pass: one Pallas kernel, 1-D grid over the batch."""
    B, F = x.shape
    assert F == F_IN, F
    tb, b_pad = _pick_tile(B)
    if b_pad != B:
        x = jnp.pad(x, ((0, b_pad - B), (0, 0)))

    const = lambda i: (0, 0)            # weights/biases stay VMEM-resident
    weight_bytes = 2 * (F_IN * HPAD + 3 * HPAD * HPAD) + 4 * 8 * HPAD
    cost = pl.CostEstimate(
        flops=2 * b_pad * (F_IN * HPAD + 3 * HPAD * HPAD),
        transcendentals=0,
        bytes_accessed=b_pad * F_IN * x.dtype.itemsize + b_pad * 4 + weight_bytes,
    )

    out = pl.pallas_call(
        mlp_kernel,
        out_shape=jax.ShapeDtypeStruct((b_pad, 1), jnp.float32),
        grid=(b_pad // tb,),
        in_specs=[
            pl.BlockSpec((tb, F_IN), lambda i: (i, 0)),   # x tile (pipelined)
            pl.BlockSpec((F_IN, HPAD), const),            # w0
            pl.BlockSpec((HPAD, HPAD), const),            # w1
            pl.BlockSpec((HPAD, HPAD), const),            # w2
            pl.BlockSpec((HPAD, HPAD), const),            # w3
            pl.BlockSpec((8, HPAD), const),               # packed biases b0..b3
        ],
        out_specs=pl.BlockSpec((tb, 1), lambda i: (i, 0)),
        compiler_params=pltpu.CompilerParams(
            dimension_semantics=("parallel",),
            vmem_limit_bytes=32 * 1024 * 1024,   # >= v5e's 16 MiB scoped default
        ),
        cost_estimate=cost,
    )(x, fp["w0"], fp["w1"], fp["w2"], fp["w3"], fp["b"])

    return out[:B, :]


def init_raw_params(key):
    """Deterministic params matching the PyTorch module's shapes (eval mode)."""
    dims = [F_IN, 128, 32, 8, 1]
    keys = jax.random.split(key, 32)
    ki = iter(range(32))
    p = {}
    # Linear layers, stored transposed: [in, out]
    for li, (din, dout) in enumerate(zip(dims[:-1], dims[1:])):
        bound = float(1.0 / jnp.sqrt(din))
        p[f"w{li}"] = jax.random.uniform(keys[next(ki)], (din, dout),
                                         jnp.float32, -bound, bound)
        p[f"b{li}"] = jax.random.uniform(keys[next(ki)], (1, dout),
                                         jnp.float32, -bound, bound)
    # BatchNorm1d running stats + affine (eval mode)
    for bi, d in enumerate(dims[1:4], start=1):
        p[f"gamma{bi}"] = 1.0 + 0.1 * jax.random.normal(keys[next(ki)], (1, d), jnp.float32)
        p[f"beta{bi}"] = 0.1 * jax.random.normal(keys[next(ki)], (1, d), jnp.float32)
        p[f"mean{bi}"] = 0.1 * jax.random.normal(keys[next(ki)], (1, d), jnp.float32)
        p[f"var{bi}"] = jax.random.uniform(keys[next(ki)], (1, d),
                                           jnp.float32, 0.5, 1.5)
    return p


def fold_and_pad(raw):
    """Fold BN affine into the Linear weights, pad widths to HPAD, pack biases."""
    def bn_affine(i):
        scale = raw[f"gamma{i}"] / jnp.sqrt(raw[f"var{i}"] + BN_EPS)
        shift = raw[f"beta{i}"] - raw[f"mean{i}"] * scale
        return scale, shift

    fp = {}
    bias_rows = []
    for li in range(4):
        w = raw[f"w{li}"]
        b = raw[f"b{li}"]
        if li < 3:                       # layers 0..2 are followed by BN
            s, t = bn_affine(li + 1)
            w = w * s                    # (din, dout) * (1, dout)
            b = b * s + t
        din, dout = w.shape
        pad_in = 0 if li == 0 else HPAD - din
        pad_out = HPAD - dout
        w = jnp.pad(w, ((0, pad_in), (0, pad_out)))
        b = jnp.pad(b, ((0, 0), (0, pad_out)))
        fp[f"w{li}"] = w.astype(jnp.bfloat16)   # bf16 MXU operands
        bias_rows.append(b.astype(jnp.float32))
    # One (8,128) f32 array: rows 0..3 are b0..b3 (BN-folded), rows 4..7 zero.
    fp["b"] = jnp.concatenate(bias_rows + [jnp.zeros((4, HPAD), jnp.float32)], axis=0)
    return fp


def net_forward_ref_folded(x, fp):
    """Plain-JAX reference with the exact same folded/padded bf16 math."""
    h = x.astype(jnp.bfloat16)
    h = jnp.dot(h, fp["w0"], preferred_element_type=jnp.float32) + fp["b"][0:1, :]
    h = _leaky_relu(h).astype(jnp.bfloat16)
    h = jnp.dot(h, fp["w1"], preferred_element_type=jnp.float32) + fp["b"][1:2, :]
    h = _leaky_relu(h).astype(jnp.bfloat16)
    h = jnp.dot(h, fp["w2"], preferred_element_type=jnp.float32) + fp["b"][2:3, :]
    h = _leaky_relu(h).astype(jnp.bfloat16)
    y = jnp.dot(h, fp["w3"], preferred_element_type=jnp.float32) + fp["b"][3:4, :]
    return jnp.clip(y, 0.0, 10.0)[:, :1]


def net_forward_ref_f32(x, raw):
    """Unfolded f32 reference matching the PyTorch eval-mode forward."""
    h = x
    for li in range(3):
        h = h @ raw[f"w{li}"] + raw[f"b{li}"]
        i = li + 1
        scale = raw[f"gamma{i}"] / jnp.sqrt(raw[f"var{i}"] + BN_EPS)
        shift = raw[f"beta{i}"] - raw[f"mean{i}"] * scale
        h = _leaky_relu(h * scale + shift)
    y = h @ raw["w3"] + raw["b3"]
    return jnp.clip(y, 0.0, 10.0)


if __name__ == "__main__":
    key = jax.random.PRNGKey(0)
    k_param, k_x1, k_x2 = jax.random.split(key, 3)
    raw = init_raw_params(k_param)
    fp = fold_and_pad(raw)

    # Case 1: batch = 256 -> TB=128, two pipelined (and v7x-shardable) tiles.
    B1 = 256
    x1 = jax.random.normal(k_x1, (B1, F_IN), dtype=jnp.float32)
    out1 = jax.block_until_ready(net_forward(x1, fp))
    assert out1.shape == (B1, 1), out1.shape
    ref1b = net_forward_ref_folded(x1, fp)
    assert jnp.allclose(out1, ref1b, atol=2e-3, rtol=2e-3), (
        float(jnp.max(jnp.abs(out1 - ref1b))))
    ref1f = net_forward_ref_f32(x1, raw)
    assert jnp.allclose(out1, ref1f, atol=0.3, rtol=0.1), (
        float(jnp.max(jnp.abs(out1 - ref1f))))

    # Case 2: ragged batch = 1000 -> TB=512, batch padding exercised.
    B2 = 1000
    x2 = jax.random.normal(k_x2, (B2, F_IN), dtype=jnp.float32)
    out2 = jax.block_until_ready(net_forward(x2, fp))
    assert out2.shape == (B2, 1), out2.shape
    ref2b = net_forward_ref_folded(x2, fp)
    assert jnp.allclose(out2, ref2b, atol=2e-3, rtol=2e-3), (
        float(jnp.max(jnp.abs(out2 - ref2b))))
    ref2f = net_forward_ref_f32(x2, raw)
    assert jnp.allclose(out2, ref2f, atol=0.3, rtol=0.1), (
        float(jnp.max(jnp.abs(out2 - ref2f))))

    print("KERNEL_OK")
</pallas_src>

<mosaic_0001>
module attributes {stable_mosaic.version = 11 : i64} {
  func.func @mlp_kernel(%arg0: i32, %arg1: memref<128x768xf32, #tpu.memory_space<vmem>>, %arg2: memref<768x128xbf16, #tpu.memory_space<vmem>>, %arg3: memref<128x128xbf16, #tpu.memory_space<vmem>>, %arg4: memref<128x128xbf16, #tpu.memory_space<vmem>>, %arg5: memref<128x128xbf16, #tpu.memory_space<vmem>>, %arg6: memref<8x128xf32, #tpu.memory_space<vmem>>, %arg7: memref<128x1xf32, #tpu.memory_space<vmem>>) attributes {dimension_semantics = [#tpu.dimension_semantics<parallel>], iteration_bounds = array<i64: 2>, scalar_prefetch = 0 : i64, scratch_operands = 0 : i64, tpu.core_type = #tpu.core_type<tc>, window_params = [{transform_indices = @transform_0, window_bounds = array<i64: 128, 768>}, {pipeline_mode = #tpu.pipeline_mode<synchronous>, transform_indices = @transform_1, window_bounds = array<i64: 768, 128>}, {pipeline_mode = #tpu.pipeline_mode<synchronous>, transform_indices = @transform_2, window_bounds = array<i64: 128, 128>}, {pipeline_mode = #tpu.pipeline_mode<synchronous>, transform_indices = @transform_3, window_bounds = array<i64: 128, 128>}, {pipeline_mode = #tpu.pipeline_mode<synchronous>, transform_indices = @transform_4, window_bounds = array<i64: 128, 128>}, {pipeline_mode = #tpu.pipeline_mode<synchronous>, transform_indices = @transform_5, window_bounds = array<i64: 8, 128>}, {transform_indices = @transform_6, window_bounds = array<i64: 128, 1>}]} {
    %c0 = arith.constant 0 : index
    %c0_0 = arith.constant 0 : index
    %0 = vector.load %arg1[%c0, %c0_0] : memref<128x768xf32, #tpu.memory_space<vmem>>, vector<128x768xf32>
    %1 = arith.truncf %0 : vector<128x768xf32> to vector<128x768xbf16>
    %c0_1 = arith.constant 0 : index
    %c0_2 = arith.constant 0 : index
    %2 = vector.load %arg2[%c0_1, %c0_2] : memref<768x128xbf16, #tpu.memory_space<vmem>>, vector<768x128xbf16>
    %cst = arith.constant dense<0.000000e+00> : vector<128x128xf32>
    %3 = tpu.matmul %1, %2, %cst {dimension_numbers = #tpu.dot_dimension_numbers<[1], [0], [0], [1], [0, 0, 1, 1], [], []>} : vector<128x768xbf16>, vector<768x128xbf16>, vector<128x128xf32> -> vector<128x128xf32>
    %c0_3 = arith.constant 0 : index
    %c0_4 = arith.constant 0 : index
    %4 = vector.load %arg6[%c0_3, %c0_4] : memref<8x128xf32, #tpu.memory_space<vmem>>, vector<1x128xf32>
    %5 = vector.broadcast %4 : vector<1x128xf32> to vector<128x128xf32>
    %6 = arith.addf %3, %5 : vector<128x128xf32>
    %cst_5 = arith.constant 0.00999999977 : f32
    %7 = vector.broadcast %cst_5 : f32 to vector<128x128xf32>
    %8 = arith.mulf %7, %6 : vector<128x128xf32>
    %9 = arith.maximumf %6, %8 : vector<128x128xf32>
    %10 = arith.truncf %9 : vector<128x128xf32> to vector<128x128xbf16>
    %c0_6 = arith.constant 0 : index
    %c0_7 = arith.constant 0 : index
    %11 = vector.load %arg3[%c0_6, %c0_7] : memref<128x128xbf16, #tpu.memory_space<vmem>>, vector<128x128xbf16>
    %cst_8 = arith.constant dense<0.000000e+00> : vector<128x128xf32>
    %12 = tpu.matmul %10, %11, %cst_8 {dimension_numbers = #tpu.dot_dimension_numbers<[1], [0], [0], [1], [0, 0, 1, 1], [], []>} : vector<128x128xbf16>, vector<128x128xbf16>, vector<128x128xf32> -> vector<128x128xf32>
    %c1 = arith.constant 1 : index
    %c0_9 = arith.constant 0 : index
    %13 = vector.load %arg6[%c1, %c0_9] : memref<8x128xf32, #tpu.memory_space<vmem>>, vector<1x128xf32>
    %14 = vector.broadcast %13 : vector<1x128xf32> to vector<128x128xf32>
    %15 = arith.addf %12, %14 : vector<128x128xf32>
    %cst_10 = arith.constant 0.00999999977 : f32
    %16 = vector.broadcast %cst_10 : f32 to vector<128x128xf32>
    %17 = arith.mulf %16, %15 : vector<128x128xf32>
    %18 = arith.maximumf %15, %17 : vector<128x128xf32>
    %19 = arith.truncf %18 : vector<128x128xf32> to vector<128x128xbf16>
    %c0_11 = arith.constant 0 : index
    %c0_12 = arith.constant 0 : index
    %20 = vector.load %arg4[%c0_11, %c0_12] : memref<128x128xbf16, #tpu.memory_space<vmem>>, vector<128x128xbf16>
    %cst_13 = arith.constant dense<0.000000e+00> : vector<128x128xf32>
    %21 = tpu.matmul %19, %20, %cst_13 {dimension_numbers = #tpu.dot_dimension_numbers<[1], [0], [0], [1], [0, 0, 1, 1], [], []>} : vector<128x128xbf16>, vector<128x128xbf16>, vector<128x128xf32> -> vector<128x128xf32>
    %c2 = arith.constant 2 : index
    %c0_14 = arith.constant 0 : index
    %22 = vector.load %arg6[%c2, %c0_14] : memref<8x128xf32, #tpu.memory_space<vmem>>, vector<1x128xf32>
    %23 = vector.broadcast %22 : vector<1x128xf32> to vector<128x128xf32>
    %24 = arith.addf %21, %23 : vector<128x128xf32>
    %cst_15 = arith.constant 0.00999999977 : f32
    %25 = vector.broadcast %cst_15 : f32 to vector<128x128xf32>
    %26 = arith.mulf %25, %24 : vector<128x128xf32>
    %27 = arith.maximumf %24, %26 : vector<128x128xf32>
    %28 = arith.truncf %27 : vector<128x128xf32> to vector<128x128xbf16>
    %c0_16 = arith.constant 0 : index
    %c0_17 = arith.constant 0 : index
    %29 = vector.load %arg5[%c0_16, %c0_17] : memref<128x128xbf16, #tpu.memory_space<vmem>>, vector<128x128xbf16>
    %cst_18 = arith.constant dense<0.000000e+00> : vector<128x128xf32>
    %30 = tpu.matmul %28, %29, %cst_18 {dimension_numbers = #tpu.dot_dimension_numbers<[1], [0], [0], [1], [0, 0, 1, 1], [], []>} : vector<128x128xbf16>, vector<128x128xbf16>, vector<128x128xf32> -> vector<128x128xf32>
    %c3 = arith.constant 3 : index
    %c0_19 = arith.constant 0 : index
    %31 = vector.load %arg6[%c3, %c0_19] : memref<8x128xf32, #tpu.memory_space<vmem>>, vector<1x128xf32>
    %32 = vector.broadcast %31 : vector<1x128xf32> to vector<128x128xf32>
    %33 = arith.addf %30, %32 : vector<128x128xf32>
    %34 = vector.extract_strided_slice %33 {offsets = [0, 0], sizes = [128, 1], strides = [1, 1]} : vector<128x128xf32> to vector<128x1xf32>
    %cst_20 = arith.constant 0.000000e+00 : f32
    %cst_21 = arith.constant 1.000000e+01 : f32
    %35 = vector.broadcast %cst_20 : f32 to vector<128x1xf32>
    %36 = arith.maximumf %35, %34 : vector<128x1xf32>
    %37 = vector.broadcast %cst_21 : f32 to vector<128x1xf32>
    %38 = arith.minimumf %37, %36 : vector<128x1xf32>
    %c0_22 = arith.constant 0 : index
    %c0_23 = arith.constant 0 : index
    %39 = vector.load %arg7[%c0_22, %c0_23] : memref<128x1xf32, #tpu.memory_space<vmem>>, vector<128x1xf32>
    tpu.vector_store %arg7[%c0_22, %c0_23], %38 {strides = array<i32>} : memref<128x1xf32, #tpu.memory_space<vmem>>, vector<128x1xf32>,
    return
  }
  func.func @transform_0(%arg0: i32) -> (i32, i32) {
    %c0_i32 = arith.constant 0 : i32
    %c0_i32_0 = arith.constant 0 : i32
    return %arg0, %c0_i32 : i32, i32
  }
  func.func @transform_1(%arg0: i32) -> (i32, i32) {
    %c0_i32 = arith.constant 0 : i32
    %c0_i32_0 = arith.constant 0 : i32
    %c0_i32_1 = arith.constant 0 : i32
    return %c0_i32, %c0_i32_0 : i32, i32
  }
  func.func @transform_2(%arg0: i32) -> (i32, i32) {
    %c0_i32 = arith.constant 0 : i32
    %c0_i32_0 = arith.constant 0 : i32
    %c0_i32_1 = arith.constant 0 : i32
    return %c0_i32, %c0_i32_0 : i32, i32
  }
  func.func @transform_3(%arg0: i32) -> (i32, i32) {
    %c0_i32 = arith.constant 0 : i32
    %c0_i32_0 = arith.constant 0 : i32
    %c0_i32_1 = arith.constant 0 : i32
    return %c0_i32, %c0_i32_0 : i32, i32
  }
  func.func @transform_4(%arg0: i32) -> (i32, i32) {
    %c0_i32 = arith.constant 0 : i32
    %c0_i32_0 = arith.constant 0 : i32
    %c0_i32_1 = arith.constant 0 : i32
    return %c0_i32, %c0_i32_0 : i32, i32
  }
  func.func @transform_5(%arg0: i32) -> (i32, i32) {
    %c0_i32 = arith.constant 0 : i32
    %c0_i32_0 = arith.constant 0 : i32
    %c0_i32_1 = arith.constant 0 : i32
    return %c0_i32, %c0_i32_0 : i32, i32
  }
  func.func @transform_6(%arg0: i32) -> (i32, i32) {
    %c0_i32 = arith.constant 0 : i32
    %c0_i32_0 = arith.constant 0 : i32
    return %arg0, %c0_i32 : i32, i32
  }
}

</mosaic_0001>

<llo_original>
// kernel: tpu_custom_call.1
$region0: #{tpu_custom_call.1}
  #allocation0 [shape = 'u32[]', space=smem, size = 0x4, offset = 0x4, fixed_abs, tag = 'smem constant byte address 0x4 - core index']
  #allocation1 [shape = 'u32[144,128]{1,0:T(1,128)}', space=vmem, size = 0x12000, scoped, tag = 'internal scratch']
  %s0 = inlined_call_operand.hbm [shape: f32[256,768], index: 0, kind: input, shape index: {}]
  %s1 = inlined_call_operand.hbm [shape: bf16[768,128], index: 1, kind: input, shape index: {}]
  %s2 = inlined_call_operand.hbm [shape: bf16[128,128], index: 2, kind: input, shape index: {}]
  %s3 = inlined_call_operand.hbm [shape: bf16[128,128], index: 3, kind: input, shape index: {}]
  %s4 = inlined_call_operand.hbm [shape: bf16[128,128], index: 4, kind: input, shape index: {}]
  %s5 = inlined_call_operand.vmem [shape: f32[8,128], index: 5, kind: input, shape index: {}]
  %s6 = inlined_call_operand.vmem [shape: f32[256,1], index: 6, kind: output, shape index: {}]
  %s7 = sld [smem:[#allocation0]]
  $region77: #{tpu_custom_call.1} parent=0
    _
  %s9 = ssub.s32 1, %s7
  %s10 = scalar_select 0, %s9, %s7
  $region1: #{tpu_custom_call.1} parent=0
    #allocation2 [shape = 'u8[786432]{0}', space=vmem, size = 0xc0000, scoped, tag = 'input window, operand 0']
    #allocation3 [shape = 's32[2]{0}', space=sflag, size = 0x8, scoped, tag = 'scoped memory for tpu_custom_call.1']
    #allocation4 [shape = 'u8[196608]{0}', space=vmem, size = 0x30000, scoped, tag = 'input window, operand 1, single buffered']
    #allocation5 [shape = 's32[1]{0}', space=sflag, size = 0x4, scoped, tag = 'scoped memory for tpu_custom_call.1']
    #allocation6 [shape = 'u8[32768]{0}', space=vmem, size = 0x8000, scoped, tag = 'input window, operand 2, single buffered']
    #allocation7 [shape = 'u8[32768]{0}', space=vmem, size = 0x8000, scoped, tag = 'input window, operand 3, single buffered']
    #allocation8 [shape = 's32[1]{0}', space=sflag, size = 0x4, scoped, tag = 'scoped memory for tpu_custom_call.1']
    #allocation9 [shape = 'u8[32768]{0}', space=vmem, size = 0x8000, scoped, tag = 'input window, operand 4, single buffered']
    %11 = vsyncpa [#allocation3], 0
    %s12 = scalar_lea.sflag [#allocation3], 1
    %13 = vsyncpa %s12, 0
    %14 = vsyncpa [#allocation5], 0
    %15 = vsyncpa [#allocation8], 0
    loop: start=0, step=1, limit=4
    $region2: #{tpu_custom_call.1} parent=1 // loop_pre_header
      _
    $region3: #{tpu_custom_call.1} parent=1 // loop_header
      %s17 = sphi 0, %s21
      %p18 = scmp.ge.s32.totalorder %s17, 4
      %s27 = sphi 0, %s29
      %s30 = sphi 0, %s27
      %s31 = sphi 0, %s30
      %s47 = sphi 0, %s31
      %s51 = sphi 0, %s51
      %s53 = sphi 0, %s51
      %s54 = sphi 0, %s53
      %s68 = sphi 0, %s54
      %s72 = sphi 0, %s72
      %s74 = sphi 0, %s72
      %s75 = sphi 0, %s74
      %s89 = sphi 0, %s75
      %s93 = sphi 0, %s93
      %s95 = sphi 0, %s93
      %s96 = sphi 0, %s95
      %s110 = sphi 0, %s96
      %s114 = sphi 0, %s114
      %s116 = sphi 0, %s114
      %s117 = sphi 0, %s116
      %s131 = sphi 0, %s117
      %s135 = sphi 0, %s135
      %s137 = sphi 0, %s135
      %s138 = sphi 0, %s137
      %s152 = sphi 0, %s138
      %s158 = sphi 0, %s160
      %s161 = sphi 0, %s158
      %s162 = sphi 0, %s161
      %s178 = sphi 0, %s162
    $region4: #{tpu_custom_call.1} parent=1 // loop_header_branch
      %20 = sbr.rel (%p18) target = $region8
    $region5: #{tpu_custom_call.1} parent=1 // loop_body
      %s22 = ssub.s32 %s17, 1
      %s23 = ssub.s32 %s17, 2
      %s24 = sadd.s32 %s17, 1
      %s25 = ssub.s32 %s17, %s24
      %p26 = scmp.eq.s32.totalorder %s25, 0
      %s28 = sadd.s32 %s27, 1
      %s29 = scalar_select %p26, %s27, %s28
      %p32 = pneg %p26
      %p33 = scmp.eq.s32.totalorder %s17, 1
      %p34 = por %p32, %p33
      %p35 = scmp.ne.s32.totalorder %s27, %s30
      %p36 = scmp.eq.s32.totalorder %s17, 0
      %p37 = por %p35, %p36
      %p38 = scmp.ne.s32.totalorder %s27, %s30
      %p39 = scmp.eq.s32.totalorder %s22, 1
      %p40 = por %p38, %p39
      %p41 = scmp.ne.s32.totalorder %s30, %s31
      %p42 = scmp.eq.s32.totalorder %s22, 0
      %p43 = por %p41, %p42
      %p44 = scmp.ne.s32.totalorder %s30, %s31
      %p45 = scmp.eq.s32.totalorder %s23, 1
      %p46 = por %p44, %p45
      %p48 = scmp.ne.s32.totalorder %s31, %s47
      %p49 = scmp.eq.s32.totalorder %s23, 0
      %p50 = por %p48, %p49
      %s52 = sadd.s32 %s51, 1
      %p55 = scmp.eq.s32.totalorder %s17, 1
      %p56 = scmp.ne.s32.totalorder %s51, %s53
      %p57 = scmp.eq.s32.totalorder %s17, 0
      %p58 = por %p56, %p57
      %p59 = scmp.ne.s32.totalorder %s51, %s53
      %p60 = scmp.eq.s32.totalorder %s22, 1
      %p61 = por %p59, %p60
      %p62 = scmp.ne.s32.totalorder %s53, %s54
      %p63 = scmp.eq.s32.totalorder %s22, 0
      %p64 = por %p62, %p63
      %p65 = scmp.ne.s32.totalorder %s53, %s54
      %p66 = scmp.eq.s32.totalorder %s23, 1
      %p67 = por %p65, %p66
      %p69 = scmp.ne.s32.totalorder %s54, %s68
      %p70 = scmp.eq.s32.totalorder %s23, 0
      %p71 = por %p69, %p70
      %s73 = sadd.s32 %s72, 1
      %p76 = scmp.eq.s32.totalorder %s17, 1
      %p77 = scmp.ne.s32.totalorder %s72, %s74
      %p78 = scmp.eq.s32.totalorder %s17, 0
      %p79 = por %p77, %p78
      %p80 = scmp.ne.s32.totalorder %s72, %s74
      %p81 = scmp.eq.s32.totalorder %s22, 1
      %p82 = por %p80, %p81
      %p83 = scmp.ne.s32.totalorder %s74, %s75
      %p84 = scmp.eq.s32.totalorder %s22, 0
      %p85 = por %p83, %p84
      %p86 = scmp.ne.s32.totalorder %s74, %s75
      %p87 = scmp.eq.s32.totalorder %s23, 1
      %p88 = por %p86, %p87
      %p90 = scmp.ne.s32.totalorder %s75, %s89
      %p91 = scmp.eq.s32.totalorder %s23, 0
      %p92 = por %p90, %p91
      %s94 = sadd.s32 %s93, 1
      %p97 = scmp.eq.s32.totalorder %s17, 1
      %p98 = scmp.ne.s32.totalorder %s93, %s95
      %p99 = scmp.eq.s32.totalorder %s17, 0
      %p100 = por %p98, %p99
      %p101 = scmp.ne.s32.totalorder %s93, %s95
      %p102 = scmp.eq.s32.totalorder %s22, 1
      %p103 = por %p101, %p102
      %p104 = scmp.ne.s32.totalorder %s95, %s96
      %p105 = scmp.eq.s32.totalorder %s22, 0
      %p106 = por %p104, %p105
      %p107 = scmp.ne.s32.totalorder %s95, %s96
      %p108 = scmp.eq.s32.totalorder %s23, 1
      %p109 = por %p107, %p108
      %p111 = scmp.ne.s32.totalorder %s96, %s110
      %p112 = scmp.eq.s32.totalorder %s23, 0
      %p113 = por %p111, %p112
      %s115 = sadd.s32 %s114, 1
      %p118 = scmp.eq.s32.totalorder %s17, 1
      %p119 = scmp.ne.s32.totalorder %s114, %s116
      %p120 = scmp.eq.s32.totalorder %s17, 0
      %p121 = por %p119, %p120
      %p122 = scmp.ne.s32.totalorder %s114, %s116
      %p123 = scmp.eq.s32.totalorder %s22, 1
      %p124 = por %p122, %p123
      %p125 = scmp.ne.s32.totalorder %s116, %s117
      %p126 = scmp.eq.s32.totalorder %s22, 0
      %p127 = por %p125, %p126
      %p128 = scmp.ne.s32.totalorder %s116, %s117
      %p129 = scmp.eq.s32.totalorder %s23, 1
      %p130 = por %p128, %p129
      %p132 = scmp.ne.s32.totalorder %s117, %s131
      %p133 = scmp.eq.s32.totalorder %s23, 0
      %p134 = por %p132, %p133
      %s136 = sadd.s32 %s135, 1
      %p139 = scmp.eq.s32.totalorder %s17, 1
      %p140 = scmp.ne.s32.totalorder %s135, %s137
      %p141 = scmp.eq.s32.totalorder %s17, 0
      %p142 = por %p140, %p141
      %p143 = scmp.ne.s32.totalorder %s135, %s137
      %p144 = scmp.eq.s32.totalorder %s22, 1
      %p145 = por %p143, %p144
      %p146 = scmp.ne.s32.totalorder %s137, %s138
      %p147 = scmp.eq.s32.totalorder %s22, 0
      %p148 = por %p146, %p147
      %p149 = scmp.ne.s32.totalorder %s137, %s138
      %p150 = scmp.eq.s32.totalorder %s23, 1
      %p151 = por %p149, %p150
      %p153 = scmp.ne.s32.totalorder %s138, %s152
      %p154 = scmp.eq.s32.totalorder %s23, 0
      %p155 = por %p153, %p154
      %s156 = ssub.s32 %s17, %s24
      %p157 = scmp.eq.s32.totalorder %s156, 0
      %s159 = sadd.s32 %s158, 1
      %s160 = scalar_select %p157, %s158, %s159
      %p163 = pneg %p157
      %p164 = scmp.eq.s32.totalorder %s17, 1
      %p165 = por %p163, %p164
      %p166 = scmp.ne.s32.totalorder %s158, %s161
      %p167 = scmp.eq.s32.totalorder %s17, 0
      %p168 = por %p166, %p167
      %p169 = scmp.ne.s32.totalorder %s158, %s161
      %p170 = scmp.eq.s32.totalorder %s22, 1
      %p171 = por %p169, %p170
      %p172 = scmp.ne.s32.totalorder %s161, %s162
      %p173 = scmp.eq.s32.totalorder %s22, 0
      %p174 = por %p172, %p173
      %p175 = scmp.ne.s32.totalorder %s161, %s162
      %p176 = scmp.eq.s32.totalorder %s23, 1
      %p177 = por %p175, %p176
      %p179 = scmp.ne.s32.totalorder %s162, %s178
      %p180 = scmp.eq.s32.totalorder %s23, 0
      %p181 = por %p179, %p180
      %p182 = scmp.le.s32.totalorder 1, %s17
      %p183 = scmp.lt.s32.totalorder %s17, 3
      %p184 = pnand %p182, %p183
      %p185 = pneg %p184
      // Predicated region
      $region9: #{tpu_custom_call.1} parent=5 // pred_check
        _
      $region10: #{tpu_custom_call.1} parent=5 // pred_check_branch
        %187 = sbr.rel (%p184) target = $region12
      $region11: #{tpu_custom_call.1} parent=5 // pred_region
        %s188 = ssub.s32 %s17, 1
        // Predicated region
        $region13: #{tpu_custom_call.1} parent=11 // pred_check
          %p189 = pneg %p64
        $region14: #{tpu_custom_call.1} parent=11 // pred_check_branch
          %191 = sbr.rel (%p189) target = $region16
        $region15: #{tpu_custom_call.1} parent=11 // pred_region
          %s193 = ssub.s32 6144, 6144
          %194 = vsyncadd [#allocation5], %s193
          %s195 = sshll.u32 [#allocation4], 4
          %s196 = int_to_ptr.vmem [resolvable:$true] %s195
          %201 = dma.hbm_to_vmem [thread:$0]  %s1, 6144, %s196, [#allocation5], 64, 64, 4
        $region16: #{tpu_custom_call.1} parent=11 // pred_fallthru
          _
        // Predicated region
        $region17: #{tpu_custom_call.1} parent=11 // pred_check
          %p202 = pneg %p85
        $region18: #{tpu_custom_call.1} parent=11 // pred_check_branch
          %204 = sbr.rel (%p202) target = $region20
        $region19: #{tpu_custom_call.1} parent=11 // pred_region
          %s206 = ssub.s32 1024, 1024
          %207 = vsyncadd [#allocation5], %s206
          %s208 = sshll.u32 [#allocation6], 4
          %s209 = int_to_ptr.vmem [resolvable:$true] %s208
          %214 = dma.hbm_to_vmem [thread:$0]  %s2, 1024, %s209, [#allocation5], 64, 64, 4
        $region20: #{tpu_custom_call.1} parent=11 // pred_fallthru
          _
        // Predicated region
        $region21: #{tpu_custom_call.1} parent=11 // pred_check
          %p215 = pneg %p106
        $region22: #{tpu_custom_call.1} parent=11 // pred_check_branch
          %217 = sbr.rel (%p215) target = $region24
        $region23: #{tpu_custom_call.1} parent=11 // pred_region
          %s219 = ssub.s32 1024, 1024
          %220 = vsyncadd [#allocation8], %s219
          %s221 = sshll.u32 [#allocation7], 4
          %s222 = int_to_ptr.vmem [resolvable:$true] %s221
          %227 = dma.hbm_to_vmem [thread:$0]  %s3, 1024, %s222, [#allocation8], 64, 64, 4
        $region24: #{tpu_custom_call.1} parent=11 // pred_fallthru
          _
        // Predicated region
        $region25: #{tpu_custom_call.1} parent=11 // pred_check
          %p228 = pneg %p127
        $region26: #{tpu_custom_call.1} parent=11 // pred_check_branch
          %230 = sbr.rel (%p228) target = $region28
        $region27: #{tpu_custom_call.1} parent=11 // pred_region
          %s232 = ssub.s32 1024, 1024
          %233 = vsyncadd [#allocation8], %s232
          %s234 = sshll.u32 [#allocation9], 4
          %s235 = int_to_ptr.vmem [resolvable:$true] %s234
          %240 = dma.hbm_to_vmem [thread:$0]  %s4, 1024, %s235, [#allocation8], 64, 64, 4
        $region28: #{tpu_custom_call.1} parent=11 // pred_fallthru
          _
        // Predicated region
        $region29: #{tpu_custom_call.1} parent=11 // pred_check
          %p241 = pneg %p148
        $region30: #{tpu_custom_call.1} parent=11 // pred_check_branch
          %243 = sbr.rel (%p241) target = $region32
        $region31: #{tpu_custom_call.1} parent=11 // pred_region
          _
        $region32: #{tpu_custom_call.1} parent=11 // pred_fallthru
          _
      $region12: #{tpu_custom_call.1} parent=5 // pred_fallthru
        _
      %p244 = scmp.lt.s32.totalorder %s17, 2
      // Predicated region
      $region33: #{tpu_custom_call.1} parent=5 // pred_check
        %p245 = pneg %p244
      $region34: #{tpu_custom_call.1} parent=5 // pred_check_branch
        %247 = sbr.rel (%p245) target = $region36
      $region35: #{tpu_custom_call.1} parent=5 // pred_region
        // Predicated region
        $region37: #{tpu_custom_call.1} parent=35 // pred_check
          %p248 = pneg %p37
        $region38: #{tpu_custom_call.1} parent=35 // pred_check_branch
          %250 = sbr.rel (%p248) target = $region40
        $region39: #{tpu_custom_call.1} parent=35 // pred_region
          %s251 = sand.u32 %s27, 1
          %s252 = scalar_lea.sflag [#allocation3], %s251
          %s253 = sand.u32 %s27, 1
          %s254 = smul.addr %s253, 768
          %s255 = scalar_lea.vmem [#allocation2], %s254
          %s256 = smul.u32 16, %s17
          %s258 = ssub.s32 12288, 12288
          %259 = vsyncadd %s252, %s258
          %s260 = smul.addr %s256, 6
          %s261 = smul.addr %s260, 128
          %s262 = scalar_lea.hbm %s0, %s261
          %s263 = sshll.u32 %s255, 4
          %s264 = int_to_ptr.vmem [resolvable:$true] %s263
          %269 = dma.hbm_to_vmem [thread:$0]  %s262, 12288, %s264, %s252, 768, 768, 48
        $region40: #{tpu_custom_call.1} parent=35 // pred_fallthru
          _
      $region36: #{tpu_custom_call.1} parent=5 // pred_fallthru
        _
      %p270 = scmp.le.s32.totalorder 1, %s17
      %p271 = scmp.lt.s32.totalorder %s17, 3
      %p272 = pnand %p270, %p271
      %p273 = pneg %p272
      // Predicated region
      $region41: #{tpu_custom_call.1} parent=5 // pred_check
        _
      $region42: #{tpu_custom_call.1} parent=5 // pred_check_branch
        %275 = sbr.rel (%p272) target = $region44
      $region43: #{tpu_custom_call.1} parent=5 // pred_region
        %s276 = ssub.s32 %s17, 1
        %s277 = sand.u32 %s30, 1
        %s278 = scalar_lea.sflag [#allocation3], %s277
        %s279 = sand.u32 %s30, 1
        %s280 = smul.addr %s279, 768
        %s281 = scalar_lea.vmem [#allocation2], %s280
        // Predicated region
        $region45: #{tpu_custom_call.1} parent=43 // pred_check
          %p282 = pneg %p43
        $region46: #{tpu_custom_call.1} parent=43 // pred_check_branch
          %284 = sbr.rel (%p282) target = $region48
        $region47: #{tpu_custom_call.1} parent=43 // pred_region
          %285 = dma.done %s278, 12288
        $region48: #{tpu_custom_call.1} parent=43 // pred_fallthru
          _
        // Predicated region
        $region49: #{tpu_custom_call.1} parent=43 // pred_check
          %p286 = pneg %p64
        $region50: #{tpu_custom_call.1} parent=43 // pred_check_branch
          %288 = sbr.rel (%p286) target = $region52
        $region51: #{tpu_custom_call.1} parent=43 // pred_region
          %289 = dma.done [#allocation5], 6144
        $region52: #{tpu_custom_call.1} parent=43 // pred_fallthru
          _
        // Predicated region
        $region53: #{tpu_custom_call.1} parent=43 // pred_check
          %p290 = pneg %p85
        $region54: #{tpu_custom_call.1} parent=43 // pred_check_branch
          %292 = sbr.rel (%p290) target = $region56
        $region55: #{tpu_custom_call.1} parent=43 // pred_region
          %293 = dma.done [#allocation5], 1024
        $region56: #{tpu_custom_call.1} parent=43 // pred_fallthru
          _
        // Predicated region
        $region57: #{tpu_custom_call.1} parent=43 // pred_check
          %p294 = pneg %p106
        $region58: #{tpu_custom_call.1} parent=43 // pred_check_branch
          %296 = sbr.rel (%p294) target = $region60
        $region59: #{tpu_custom_call.1} parent=43 // pred_region
          %297 = dma.done [#allocation8], 1024
        $region60: #{tpu_custom_call.1} parent=43 // pred_fallthru
          _
        // Predicated region
        $region61: #{tpu_custom_call.1} parent=43 // pred_check
          %p298 = pneg %p127
        $region62: #{tpu_custom_call.1} parent=43 // pred_check_branch
          %300 = sbr.rel (%p298) target = $region64
        $region63: #{tpu_custom_call.1} parent=43 // pred_region
          %301 = dma.done [#allocation8], 1024
        $region64: #{tpu_custom_call.1} parent=43 // pred_fallthru
          _
        %s302 = sand.u32 %s30, 1
        %s303 = scalar_lea.sflag [#allocation3], %s302
        %s304 = sand.u32 %s30, 1
        %s305 = smul.addr %s304, 768
        %s306 = scalar_lea.vmem [#allocation2], %s305
        %p307 = pneg %p43
        %p308 = pneg %p40
        %p309 = pneg %p64
        %p310 = pneg %p61
        %p311 = pneg %p85
        %p312 = pneg %p82
        %p313 = pneg %p106
        %p314 = pneg %p103
        %p315 = pneg %p127
        %p316 = pneg %p124
        %p317 = pneg %p148
        %p318 = pneg %p145
        %p319 = pneg %p174
        %p320 = pneg %p171
        %s321 = smul.u32 16, %s22
        %p322 = scmp.lt.s32.totalorder %s321, 31
        %s323 = scalar_select %p322, %s321, 31
        %s324 = smul.addr %s323, 8
        %s325 = scalar_lea.vmem %s6, %s324
        %s326 = smul.u32 16, %s22
        %s327 = smul.u32 16, %s22
        %p328 = scmp.lt.s32.totalorder %s327, 31
        %s329 = scalar_select %p328, %s327, 31
        %s330 = smul.addr %s329, 8
        %s331 = scalar_lea.vmem %s6, %s330
        %s332 = smul.u32 16, %s22
        %v334 = vld [vmem:[%s281] sm:$0xff]
        %v335 = vld [vmem:[%s281 + $0x8] sm:$0xff]
        %v336 = vld [vmem:[%s281 + $0x10] sm:$0xff]
        %v337 = vld [vmem:[%s281 + $0x18] sm:$0xff]
        %v338 = vld [vmem:[%s281 + $0x20] sm:$0xff]
        %v339 = vld [vmem:[%s281 + $0x28] sm:$0xff]
        %v340 = vld [vmem:[%s281 + $0x30] sm:$0xff]
        %v341 = vld [vmem:[%s281 + $0x38] sm:$0xff]
        %v342 = vld [vmem:[%s281 + $0x40] sm:$0xff]
        %v343 = vld [vmem:[%s281 + $0x48] sm:$0xff]
        %v344 = vld [vmem:[%s281 + $0x50] sm:$0xff]
        %v345 = vld [vmem:[%s281 + $0x58] sm:$0xff]
        %v346 = vld [vmem:[%s281 + $0x60] sm:$0xff]
        %v347 = vld [vmem:[%s281 + $0x68] sm:$0xff]
        %v348 = vld [vmem:[%s281 + $0x70] sm:$0xff]
        %v349 = vld [vmem:[%s281 + $0x78] sm:$0xff]
        %v350 = vld [vmem:[%s281 + $0x80] sm:$0xff]
        %v351 = vld [vmem:[%s281 + $0x88] sm:$0xff]
        %v352 = vld [vmem:[%s281 + $0x90] sm:$0xff]
        %v353 = vld [vmem:[%s281 + $0x98] sm:$0xff]
        %v354 = vld [vmem:[%s281 + $0xa0] sm:$0xff]
        %v355 = vld [vmem:[%s281 + $0xa8] sm:$0xff]
        %v356 = vld [vmem:[%s281 + $0xb0] sm:$0xff]
        %v357 = vld [vmem:[%s281 + $0xb8] sm:$0xff]
        %v358 = vld [vmem:[%s281 + $0xc0] sm:$0xff]
        %v359 = vld [vmem:[%s281 + $0xc8] sm:$0xff]
        %v360 = vld [vmem:[%s281 + $0xd0] sm:$0xff]
        %v361 = vld [vmem:[%s281 + $0xd8] sm:$0xff]
        %v362 = vld [vmem:[%s281 + $0xe0] sm:$0xff]
        %v363 = vld [vmem:[%s281 + $0xe8] sm:$0xff]
        %v364 = vld [vmem:[%s281 + $0xf0] sm:$0xff]
        %v365 = vld [vmem:[%s281 + $0xf8] sm:$0xff]
        %v366 = vld [vmem:[%s281 + $0x100] sm:$0xff]
        %v367 = vld [vmem:[%s281 + $0x108] sm:$0xff]
        %v368 = vld [vmem:[%s281 + $0x110] sm:$0xff]
        %v369 = vld [vmem:[%s281 + $0x118] sm:$0xff]
        %v370 = vld [vmem:[%s281 + $0x120] sm:$0xff]
        %v371 = vld [vmem:[%s281 + $0x128] sm:$0xff]
        %v372 = vld [vmem:[%s281 + $0x130] sm:$0xff]
        %v373 = vld [vmem:[%s281 + $0x138] sm:$0xff]
        %v374 = vld [vmem:[%s281 + $0x140] sm:$0xff]
        %v375 = vld [vmem:[%s281 + $0x148] sm:$0xff]
        %v376 = vld [vmem:[%s281 + $0x150] sm:$0xff]
        %v377 = vld [vmem:[%s281 + $0x158] sm:$0xff]
        %v378 = vld [vmem:[%s281 + $0x160] sm:$0xff]
        %v379 = vld [vmem:[%s281 + $0x168] sm:$0xff]
        %v380 = vld [vmem:[%s281 + $0x170] sm:$0xff]
        %v381 = vld [vmem:[%s281 + $0x178] sm:$0xff]
        %v382 = vld [vmem:[%s281 + $0x180] sm:$0xff]
        %v383 = vld [vmem:[%s281 + $0x188] sm:$0xff]
        %v384 = vld [vmem:[%s281 + $0x190] sm:$0xff]
        %v385 = vld [vmem:[%s281 + $0x198] sm:$0xff]
        %v386 = vld [vmem:[%s281 + $0x1a0] sm:$0xff]
        %v387 = vld [vmem:[%s281 + $0x1a8] sm:$0xff]
        %v388 = vld [vmem:[%s281 + $0x1b0] sm:$0xff]
        %v389 = vld [vmem:[%s281 + $0x1b8] sm:$0xff]
        %v390 = vld [vmem:[%s281 + $0x1c0] sm:$0xff]
        %v391 = vld [vmem:[%s281 + $0x1c8] sm:$0xff]
        %v392 = vld [vmem:[%s281 + $0x1d0] sm:$0xff]
        %v393 = vld [vmem:[%s281 + $0x1d8] sm:$0xff]
        %v394 = vld [vmem:[%s281 + $0x1e0] sm:$0xff]
        %v395 = vld [vmem:[%s281 + $0x1e8] sm:$0xff]
        %v396 = vld [vmem:[%s281 + $0x1f0] sm:$0xff]
        %v397 = vld [vmem:[%s281 + $0x1f8] sm:$0xff]
        %v398 = vld [vmem:[%s281 + $0x200] sm:$0xff]
        %v399 = vld [vmem:[%s281 + $0x208] sm:$0xff]
        %v400 = vld [vmem:[%s281 + $0x210] sm:$0xff]
        %v401 = vld [vmem:[%s281 + $0x218] sm:$0xff]
        %v402 = vld [vmem:[%s281 + $0x220] sm:$0xff]
        %v403 = vld [vmem:[%s281 + $0x228] sm:$0xff]
        %v404 = vld [vmem:[%s281 + $0x230] sm:$0xff]
        %v405 = vld [vmem:[%s281 + $0x238] sm:$0xff]
        %v406 = vld [vmem:[%s281 + $0x240] sm:$0xff]
        %v407 = vld [vmem:[%s281 + $0x248] sm:$0xff]
        %v408 = vld [vmem:[%s281 + $0x250] sm:$0xff]
        %v409 = vld [vmem:[%s281 + $0x258] sm:$0xff]
        %v410 = vld [vmem:[%s281 + $0x260] sm:$0xff]
        %v411 = vld [vmem:[%s281 + $0x268] sm:$0xff]
        %v412 = vld [vmem:[%s281 + $0x270] sm:$0xff]
        %v413 = vld [vmem:[%s281 + $0x278] sm:$0xff]
        %v414 = vld [vmem:[%s281 + $0x280] sm:$0xff]
        %v415 = vld [vmem:[%s281 + $0x288] sm:$0xff]
        %v416 = vld [vmem:[%s281 + $0x290] sm:$0xff]
        %v417 = vld [vmem:[%s281 + $0x298] sm:$0xff]
        %v418 = vld [vmem:[%s281 + $0x2a0] sm:$0xff]
        %v419 = vld [vmem:[%s281 + $0x2a8] sm:$0xff]
        %v420 = vld [vmem:[%s281 + $0x2b0] sm:$0xff]
        %v421 = vld [vmem:[%s281 + $0x2b8] sm:$0xff]
        %v422 = vld [vmem:[%s281 + $0x2c0] sm:$0xff]
        %v423 = vld [vmem:[%s281 + $0x2c8] sm:$0xff]
        %v424 = vld [vmem:[%s281 + $0x2d0] sm:$0xff]
        %v425 = vld [vmem:[%s281 + $0x2d8] sm:$0xff]
        %v426 = vld [vmem:[%s281 + $0x2e0] sm:$0xff]
        %v427 = vld [vmem:[%s281 + $0x2e8] sm:$0xff]
        %v428 = vld [vmem:[%s281 + $0x2f0] sm:$0xff]
        %v429 = vld [vmem:[%s281 + $0x2f8] sm:$0xff]
        %v430 = vpack.c.bf16 %v340, %v334
        %v431 = vpack.c.bf16 %v341, %v335
        %v432 = vpack.c.bf16 %v342, %v336
        %v433 = vpack.c.bf16 %v343, %v337
        %v434 = vpack.c.bf16 %v344, %v338
        %v435 = vpack.c.bf16 %v345, %v339
        %v436 = vpack.c.bf16 %v352, %v346
        %v437 = vpack.c.bf16 %v353, %v347
        %v438 = vpack.c.bf16 %v354, %v348
        %v439 = vpack.c.bf16 %v355, %v349
        %v440 = vpack.c.bf16 %v356, %v350
        %v441 = vpack.c.bf16 %v357, %v351
        %v442 = vpack.c.bf16 %v364, %v358
        %v443 = vpack.c.bf16 %v365, %v359
        %v444 = vpack.c.bf16 %v366, %v360
        %v445 = vpack.c.bf16 %v367, %v361
        %v446 = vpack.c.bf16 %v368, %v362
        %v447 = vpack.c.bf16 %v369, %v363
        %v448 = vpack.c.bf16 %v376, %v370
        %v449 = vpack.c.bf16 %v377, %v371
        %v450 = vpack.c.bf16 %v378, %v372
        %v451 = vpack.c.bf16 %v379, %v373
        %v452 = vpack.c.bf16 %v380, %v374
        %v453 = vpack.c.bf16 %v381, %v375
        %v454 = vpack.c.bf16 %v388, %v382
        %v455 = vpack.c.bf16 %v389, %v383
        %v456 = vpack.c.bf16 %v390, %v384
        %v457 = vpack.c.bf16 %v391, %v385
        %v458 = vpack.c.bf16 %v392, %v386
        %v459 = vpack.c.bf16 %v393, %v387
        %v460 = vpack.c.bf16 %v400, %v394
        %v461 = vpack.c.bf16 %v401, %v395
        %v462 = vpack.c.bf16 %v402, %v396
        %v463 = vpack.c.bf16 %v403, %v397
        %v464 = vpack.c.bf16 %v404, %v398
        %v465 = vpack.c.bf16 %v405, %v399
        %v466 = vpack.c.bf16 %v412, %v406
        %v467 = vpack.c.bf16 %v413, %v407
        %v468 = vpack.c.bf16 %v414, %v408
        %v469 = vpack.c.bf16 %v415, %v409
        %v470 = vpack.c.bf16 %v416, %v410
        %v471 = vpack.c.bf16 %v417, %v411
        %v472 = vpack.c.bf16 %v424, %v418
        %v473 = vpack.c.bf16 %v425, %v419
        %v474 = vpack.c.bf16 %v426, %v420
        %v475 = vpack.c.bf16 %v427, %v421
        %v476 = vpack.c.bf16 %v428, %v422
        %v477 = vpack.c.bf16 %v429, %v423
        %v478 = vld [vmem:[#allocation4] sm:$0xf]
        %v479 = vld [vmem:[#allocation4 + $0x4] sm:$0xf]
        %v480 = vld [vmem:[#allocation4 + $0x8] sm:$0xf]
        %v481 = vld [vmem:[#allocation4 + $0xc] sm:$0xf]
        %v482 = vld [vmem:[#allocation4 + $0x10] sm:$0xf]
        %v483 = vld [vmem:[#allocation4 + $0x14] sm:$0xf]
        %v484 = vld [vmem:[#allocation4 + $0x18] sm:$0xf]
        %v485 = vld [vmem:[#allocation4 + $0x1c] sm:$0xf]
        %v486 = vld [vmem:[#allocation4 + $0x20] sm:$0xf]
        %v487 = vld [vmem:[#allocation4 + $0x24] sm:$0xf]
        %v488 = vld [vmem:[#allocation4 + $0x28] sm:$0xf]
        %v489 = vld [vmem:[#allocation4 + $0x2c] sm:$0xf]
        %v490 = vld [vmem:[#allocation4 + $0x30] sm:$0xf]
        %v491 = vld [vmem:[#allocation4 + $0x34] sm:$0xf]
        %v492 = vld [vmem:[#allocation4 + $0x38] sm:$0xf]
        %v493 = vld [vmem:[#allocation4 + $0x3c] sm:$0xf]
        %v494 = vld [vmem:[#allocation4 + $0x40] sm:$0xf]
        %v495 = vld [vmem:[#allocation4 + $0x44] sm:$0xf]
        %v496 = vld [vmem:[#allocation4 + $0x48] sm:$0xf]
        %v497 = vld [vmem:[#allocation4 + $0x4c] sm:$0xf]
        %v498 = vld [vmem:[#allocation4 + $0x50] sm:$0xf]
        %v499 = vld [vmem:[#allocation4 + $0x54] sm:$0xf]
        %v500 = vld [vmem:[#allocation4 + $0x58] sm:$0xf]
        %v501 = vld [vmem:[#allocation4 + $0x5c] sm:$0xf]
        %v502 = vld [vmem:[#allocation4 + $0x60] sm:$0xf]
        %v503 = vld [vmem:[#allocation4 + $0x64] sm:$0xf]
        %v504 = vld [vmem:[#allocation4 + $0x68] sm:$0xf]
        %v505 = vld [vmem:[#allocation4 + $0x6c] sm:$0xf]
        %v506 = vld [vmem:[#allocation4 + $0x70] sm:$0xf]
        %v507 = vld [vmem:[#allocation4 + $0x74] sm:$0xf]
        %v508 = vld [vmem:[#allocation4 + $0x78] sm:$0xf]
        %v509 = vld [vmem:[#allocation4 + $0x7c] sm:$0xf]
        %v510 = vld [vmem:[#allocation4 + $0x80] sm:$0xf]
        %v511 = vld [vmem:[#allocation4 + $0x84] sm:$0xf]
        %v512 = vld [vmem:[#allocation4 + $0x88] sm:$0xf]
        %v513 = vld [vmem:[#allocation4 + $0x8c] sm:$0xf]
        %v514 = vld [vmem:[#allocation4 + $0x90] sm:$0xf]
        %v515 = vld [vmem:[#allocation4 + $0x94] sm:$0xf]
        %v516 = vld [vmem:[#allocation4 + $0x98] sm:$0xf]
        %v517 = vld [vmem:[#allocation4 + $0x9c] sm:$0xf]
        %v518 = vld [vmem:[#allocation4 + $0xa0] sm:$0xf]
        %v519 = vld [vmem:[#allocation4 + $0xa4] sm:$0xf]
        %v520 = vld [vmem:[#allocation4 + $0xa8] sm:$0xf]
        %v521 = vld [vmem:[#allocation4 + $0xac] sm:$0xf]
        %v522 = vld [vmem:[#allocation4 + $0xb0] sm:$0xf]
        %v523 = vld [vmem:[#allocation4 + $0xb4] sm:$0xf]
        %v524 = vld [vmem:[#allocation4 + $0xb8] sm:$0xf]
        %v525 = vld [vmem:[#allocation4 + $0xbc] sm:$0xf]
        %v526 = vld [vmem:[#allocation4 + $0xc0] sm:$0xf]
        %v527 = vld [vmem:[#allocation4 + $0xc4] sm:$0xf]
        %v528 = vld [vmem:[#allocation4 + $0xc8] sm:$0xf]
        %v529 = vld [vmem:[#allocation4 + $0xcc] sm:$0xf]
        %v530 = vld [vmem:[#allocation4 + $0xd0] sm:$0xf]
        %v531 = vld [vmem:[#allocation4 + $0xd4] sm:$0xf]
        %v532 = vld [vmem:[#allocation4 + $0xd8] sm:$0xf]
        %v533 = vld [vmem:[#allocation4 + $0xdc] sm:$0xf]
        %v534 = vld [vmem:[#allocation4 + $0xe0] sm:$0xf]
        %v535 = vld [vmem:[#allocation4 + $0xe4] sm:$0xf]
        %v536 = vld [vmem:[#allocation4 + $0xe8] sm:$0xf]
        %v537 = vld [vmem:[#allocation4 + $0xec] sm:$0xf]
        %v538 = vld [vmem:[#allocation4 + $0xf0] sm:$0xf]
        %v539 = vld [vmem:[#allocation4 + $0xf4] sm:$0xf]
        %v540 = vld [vmem:[#allocation4 + $0xf8] sm:$0xf]
        %v541 = vld [vmem:[#allocation4 + $0xfc] sm:$0xf]
        %v542 = vld [vmem:[#allocation4 + $0x100] sm:$0xf]
        %v543 = vld [vmem:[#allocation4 + $0x104] sm:$0xf]
        %v544 = vld [vmem:[#allocation4 + $0x108] sm:$0xf]
        %v545 = vld [vmem:[#allocation4 + $0x10c] sm:$0xf]
        %v546 = vld [vmem:[#allocation4 + $0x110] sm:$0xf]
        %v547 = vld [vmem:[#allocation4 + $0x114] sm:$0xf]
        %v548 = vld [vmem:[#allocation4 + $0x118] sm:$0xf]
        %v549 = vld [vmem:[#allocation4 + $0x11c] sm:$0xf]
        %v550 = vld [vmem:[#allocation4 + $0x120] sm:$0xf]
        %v551 = vld [vmem:[#allocation4 + $0x124] sm:$0xf]
        %v552 = vld [vmem:[#allocation4 + $0x128] sm:$0xf]
        %v553 = vld [vmem:[#allocation4 + $0x12c] sm:$0xf]
        %v554 = vld [vmem:[#allocation4 + $0x130] sm:$0xf]
        %v555 = vld [vmem:[#allocation4 + $0x134] sm:$0xf]
        %v556 = vld [vmem:[#allocation4 + $0x138] sm:$0xf]
        %v557 = vld [vmem:[#allocation4 + $0x13c] sm:$0xf]
        %v558 = vld [vmem:[#allocation4 + $0x140] sm:$0xf]
        %v559 = vld [vmem:[#allocation4 + $0x144] sm:$0xf]
        %v560 = vld [vmem:[#allocation4 + $0x148] sm:$0xf]
        %v561 = vld [vmem:[#allocation4 + $0x14c] sm:$0xf]
        %v562 = vld [vmem:[#allocation4 + $0x150] sm:$0xf]
        %v563 = vld [vmem:[#allocation4 + $0x154] sm:$0xf]
        %v564 = vld [vmem:[#allocation4 + $0x158] sm:$0xf]
        %v565 = vld [vmem:[#allocation4 + $0x15c] sm:$0xf]
        %v566 = vld [vmem:[#allocation4 + $0x160] sm:$0xf]
        %v567 = vld [vmem:[#allocation4 + $0x164] sm:$0xf]
        %v568 = vld [vmem:[#allocation4 + $0x168] sm:$0xf]
        %v569 = vld [vmem:[#allocation4 + $0x16c] sm:$0xf]
        %v570 = vld [vmem:[#allocation4 + $0x170] sm:$0xf]
        %v571 = vld [vmem:[#allocation4 + $0x174] sm:$0xf]
        %v572 = vld [vmem:[#allocation4 + $0x178] sm:$0xf]
        %v573 = vld [vmem:[#allocation4 + $0x17c] sm:$0xf]
        %v574 = vld [vmem:[%s5] sm:$0x1]
        %v575 = vlaneseq
        %v576 = vshrl.u32 %v575, 7
        %v577 = vsub.s32 0, %v576
        %v578 = vrot.slane %v574, %v577
        %v675 = vunpack.c.l.b16 %v478
        %v676 = vunpack.c.l.b16 %v479
        %v677 = vunpack.c.l.b16 %v480
        %v678 = vunpack.c.l.b16 %v481
        %v679 = vunpack.c.l.b16 %v482
        %v680 = vunpack.c.l.b16 %v483
        %v681 = vunpack.c.l.b16 %v484
        %v682 = vunpack.c.l.b16 %v485
        %v683 = vunpack.c.l.b16 %v486
        %v684 = vunpack.c.l.b16 %v487
        %v685 = vunpack.c.l.b16 %v488
        %v686 = vunpack.c.l.b16 %v489
        %v687 = vunpack.c.l.b16 %v490
        %v688 = vunpack.c.l.b16 %v491
        %v689 = vunpack.c.l.b16 %v492
        %v690 = vunpack.c.l.b16 %v493
        %v691 = vunpack.c.l.b16 %v494
        %v692 = vunpack.c.l.b16 %v495
        %v693 = vunpack.c.l.b16 %v496
        %v694 = vunpack.c.l.b16 %v497
        %v695 = vunpack.c.l.b16 %v498
        %v696 = vunpack.c.l.b16 %v499
        %v697 = vunpack.c.l.b16 %v500
        %v698 = vunpack.c.l.b16 %v501
        %v699 = vunpack.c.l.b16 %v502
        %v700 = vunpack.c.l.b16 %v503
        %v701 = vunpack.c.l.b16 %v504
        %v702 = vunpack.c.l.b16 %v505
        %v703 = vunpack.c.l.b16 %v506
        %v704 = vunpack.c.l.b16 %v507
        %v705 = vunpack.c.l.b16 %v508
        %v706 = vunpack.c.l.b16 %v509
        %v707 = vunpack.c.l.b16 %v510
        %v708 = vunpack.c.l.b16 %v511
        %v709 = vunpack.c.l.b16 %v512
        %v710 = vunpack.c.l.b16 %v513
        %v711 = vunpack.c.l.b16 %v514
        %v712 = vunpack.c.l.b16 %v515
        %v713 = vunpack.c.l.b16 %v516
        %v714 = vunpack.c.l.b16 %v517
        %v715 = vunpack.c.l.b16 %v518
        %v716 = vunpack.c.l.b16 %v519
        %v717 = vunpack.c.l.b16 %v520
        %v718 = vunpack.c.l.b16 %v521
        %v719 = vunpack.c.l.b16 %v522
        %v720 = vunpack.c.l.b16 %v523
        %v721 = vunpack.c.l.b16 %v524
        %v722 = vunpack.c.l.b16 %v525
        %v723 = vunpack.c.l.b16 %v526
        %v724 = vunpack.c.l.b16 %v527
        %v725 = vunpack.c.l.b16 %v528
        %v726 = vunpack.c.l.b16 %v529
        %v727 = vunpack.c.l.b16 %v530
        %v728 = vunpack.c.l.b16 %v531
        %v729 = vunpack.c.l.b16 %v532
        %v730 = vunpack.c.l.b16 %v533
        %v731 = vunpack.c.l.b16 %v534
        %v732 = vunpack.c.l.b16 %v535
        %v733 = vunpack.c.l.b16 %v536
        %v734 = vunpack.c.l.b16 %v537
        %v735 = vunpack.c.l.b16 %v538
        %v736 = vunpack.c.l.b16 %v539
        %v737 = vunpack.c.l.b16 %v540
        %v738 = vunpack.c.l.b16 %v541
        %v739 = vunpack.c.l.b16 %v542
        %v740 = vunpack.c.l.b16 %v543
        %v741 = vunpack.c.l.b16 %v544
        %v742 = vunpack.c.l.b16 %v545
        %v743 = vunpack.c.l.b16 %v546
        %v744 = vunpack.c.l.b16 %v547
        %v745 = vunpack.c.l.b16 %v548
        %v746 = vunpack.c.l.b16 %v549
        %v747 = vunpack.c.l.b16 %v550
        %v748 = vunpack.c.l.b16 %v551
        %v749 = vunpack.c.l.b16 %v552
        %v750 = vunpack.c.l.b16 %v553
        %v751 = vunpack.c.l.b16 %v554
        %v752 = vunpack.c.l.b16 %v555
        %v753 = vunpack.c.l.b16 %v556
        %v754 = vunpack.c.l.b16 %v557
        %v755 = vunpack.c.l.b16 %v558
        %v756 = vunpack.c.l.b16 %v559
        %v757 = vunpack.c.l.b16 %v560
        %v758 = vunpack.c.l.b16 %v561
        %v759 = vunpack.c.l.b16 %v562
        %v760 = vunpack.c.l.b16 %v563
        %v761 = vunpack.c.l.b16 %v564
        %v762 = vunpack.c.l.b16 %v565
        %v763 = vunpack.c.l.b16 %v566
        %v764 = vunpack.c.l.b16 %v567
        %v765 = vunpack.c.l.b16 %v568
        %v766 = vunpack.c.l.b16 %v569
        %v767 = vunpack.c.l.b16 %v570
        %v768 = vunpack.c.l.b16 %v571
        %v769 = vunpack.c.l.b16 %v572
        %v770 = vunpack.c.l.b16 %v573
        %v771 = vpack.c.b16 %v676, %v675
        %v772 = vpack.c.b16 %v678, %v677
        %v773 = vpack.c.b16 %v680, %v679
        %v774 = vpack.c.b16 %v682, %v681
        %v775 = vpack.c.b16 %v684, %v683
        %v776 = vpack.c.b16 %v686, %v685
        %v777 = vpack.c.b16 %v688, %v687
        %v778 = vpack.c.b16 %v690, %v689
        %v779 = vpack.c.b16 %v692, %v691
        %v780 = vpack.c.b16 %v694, %v693
        %v781 = vpack.c.b16 %v696, %v695
        %v782 = vpack.c.b16 %v698, %v697
        %v783 = vpack.c.b16 %v700, %v699
        %v784 = vpack.c.b16 %v702, %v701
        %v785 = vpack.c.b16 %v704, %v703
        %v786 = vpack.c.b16 %v706, %v705
        %v787 = vpack.c.b16 %v708, %v707
        %v788 = vpack.c.b16 %v710, %v709
        %v789 = vpack.c.b16 %v712, %v711
        %v790 = vpack.c.b16 %v714, %v713
        %v791 = vpack.c.b16 %v716, %v715
        %v792 = vpack.c.b16 %v718, %v717
        %v793 = vpack.c.b16 %v720, %v719
        %v794 = vpack.c.b16 %v722, %v721
        %v795 = vpack.c.b16 %v724, %v723
        %v796 = vpack.c.b16 %v726, %v725
        %v797 = vpack.c.b16 %v728, %v727
        %v798 = vpack.c.b16 %v730, %v729
        %v799 = vpack.c.b16 %v732, %v731
        %v800 = vpack.c.b16 %v734, %v733
        %v801 = vpack.c.b16 %v736, %v735
        %v802 = vpack.c.b16 %v738, %v737
        %v803 = vpack.c.b16 %v740, %v739
        %v804 = vpack.c.b16 %v742, %v741
        %v805 = vpack.c.b16 %v744, %v743
        %v806 = vpack.c.b16 %v746, %v745
        %v807 = vpack.c.b16 %v748, %v747
        %v808 = vpack.c.b16 %v750, %v749
        %v809 = vpack.c.b16 %v752, %v751
        %v810 = vpack.c.b16 %v754, %v753
        %v811 = vpack.c.b16 %v756, %v755
        %v812 = vpack.c.b16 %v758, %v757
        %v813 = vpack.c.b16 %v760, %v759
        %v814 = vpack.c.b16 %v762, %v761
        %v815 = vpack.c.b16 %v764, %v763
        %v816 = vpack.c.b16 %v766, %v765
        %v817 = vpack.c.b16 %v768, %v767
        %v818 = vpack.c.b16 %v770, %v769
        %867 = vmatprep.subr.bf16.mxu0 0
        %868 = vmatpush1.bf16.msra.mxu0 %v771
        %869 = vmatprep.subr.bf16.mxu0 0
        %870 = vmatpush1.bf16.msra.mxu0 %v772
        %871 = vmatprep.subr.bf16.mxu0 0
        %872 = vmatpush1.bf16.msra.mxu0 %v773
        %873 = vmatprep.subr.bf16.mxu0 0
        %874 = vmatpush1.bf16.msra.mxu0 %v774
        %875 = vmatprep.subr.bf16.mxu0 0
        %876 = vmatpush1.bf16.msra.mxu0 %v775
        %877 = vmatprep.subr.bf16.mxu0 0
        %878 = vmatpush1.bf16.msra.mxu0 %v776
        %879 = vmatprep.subr.bf16.mxu0 0
        %880 = vmatpush1.bf16.msra.mxu0 %v777
        %881 = vmatprep.subr.bf16.mxu0 0
        %882 = vmatpush1.bf16.msra.mxu0 %v778
        %883 = vmatprep.subr.bf16.mxu0 0
        %884 = vmatpush1.bf16.msra.mxu0 %v779
        %885 = vmatprep.subr.bf16.mxu0 0
        %886 = vmatpush1.bf16.msra.mxu0 %v780
        %887 = vmatprep.subr.bf16.mxu0 0
        %888 = vmatpush1.bf16.msra.mxu0 %v781
        %889 = vmatprep.subr.bf16.mxu0 0
        %890 = vmatpush1.bf16.msra.mxu0 %v782
        %891 = vmatprep.subr.bf16.mxu0 0
        %892 = vmatpush1.bf16.msra.mxu0 %v783
        %893 = vmatprep.subr.bf16.mxu0 0
        %894 = vmatpush1.bf16.msra.mxu0 %v784
        %895 = vmatprep.subr.bf16.mxu0 0
        %896 = vmatpush1.bf16.msra.mxu0 %v785
        %897 = vmatprep.subr.bf16.mxu0 0
        %898 = vmatpush1.bf16.msra.mxu0 %v786
        %899 = vmatprep.mubr.bf16.mxu0 %v431
        %900 = vmatmul.mubr.bf16.gmra.mrb[0].mxu0 %v430
        %v901 = vpop.f32.mrb[0].mxu0
        %v902 = vadd.f32 %v578, %v901
        %v903 = vpop.f32.mrb[0].mxu0
        %v904 = vpop.f32.mrb[0].mxu0
        %v905 = vadd.f32 %v578, %v904
        %v906 = vpop.f32.mrb[0].mxu0
        %907 = vmatprep.mubr.bf16.mxu0 %v437
        %908 = vmatmul.mubr.bf16.gmra.mrb[0].mxu0 %v436
        %v909 = vpop.f32.mrb[0].mxu0
        %v910 = vadd.f32 %v578, %v909
        %v911 = vpop.f32.mrb[0].mxu0
        %v912 = vpop.f32.mrb[0].mxu0
        %v913 = vadd.f32 %v578, %v912
        %v914 = vpop.f32.mrb[0].mxu0
        %915 = vmatprep.mubr.bf16.mxu0 %v443
        %916 = vmatmul.mubr.bf16.gmra.mrb[0].mxu0 %v442
        %v917 = vpop.f32.mrb[0].mxu0
        %v918 = vadd.f32 %v578, %v917
        %v919 = vpop.f32.mrb[0].mxu0
        %v920 = vpop.f32.mrb[0].mxu0
        %v921 = vadd.f32 %v578, %v920
        %v922 = vpop.f32.mrb[0].mxu0
        %923 = vmatprep.mubr.bf16.mxu0 %v449
        %924 = vmatmul.mubr.bf16.gmra.mrb[0].mxu0 %v448
        %v925 = vpop.f32.mrb[0].mxu0
        %v926 = vadd.f32 %v578, %v925
        %v927 = vpop.f32.mrb[0].mxu0
        %v928 = vpop.f32.mrb[0].mxu0
        %v929 = vadd.f32 %v578, %v928
        %v930 = vpop.f32.mrb[0].mxu0
        %931 = vmatprep.mubr.bf16.mxu0 %v455
        %932 = vmatmul.mubr.bf16.gmra.mrb[0].mxu0 %v454
        %v933 = vpop.f32.mrb[0].mxu0
        %v934 = vadd.f32 %v578, %v933
        %v935 = vpop.f32.mrb[0].mxu0
        %v936 = vpop.f32.mrb[0].mxu0
        %v937 = vadd.f32 %v578, %v936
        %v938 = vpop.f32.mrb[0].mxu0
        %939 = vmatprep.mubr.bf16.mxu0 %v461
        %940 = vmatmul.mubr.bf16.gmra.mrb[0].mxu0 %v460
        %v941 = vpop.f32.mrb[0].mxu0
        %v942 = vadd.f32 %v578, %v941
        %v943 = vpop.f32.mrb[0].mxu0
        %v944 = vpop.f32.mrb[0].mxu0
        %v945 = vadd.f32 %v578, %v944
        %v946 = vpop.f32.mrb[0].mxu0
        %947 = vmatprep.mubr.bf16.mxu0 %v467
        %948 = vmatmul.mubr.bf16.gmra.mrb[0].mxu0 %v466
        %v949 = vpop.f32.mrb[0].mxu0
        %v950 = vadd.f32 %v578, %v949
        %v951 = vpop.f32.mrb[0].mxu0
        %v952 = vpop.f32.mrb[0].mxu0
        %v953 = vadd.f32 %v578, %v952
        %v954 = vpop.f32.mrb[0].mxu0
        %955 = vmatprep.mubr.bf16.mxu0 %v473
        %956 = vmatmul.mubr.bf16.gmra.mrb[0].mxu0 %v472
        %v957 = vpop.f32.mrb[0].mxu0
        %v958 = vadd.f32 %v578, %v957
        %v959 = vpop.f32.mrb[0].mxu0
        %v960 = vpop.f32.mrb[0].mxu0
        %v961 = vadd.f32 %v578, %v960
        %v962 = vpop.f32.mrb[0].mxu0
        %963 = vdwg.mxu0
        %964 = vmatprep.subr.bf16.mxu0 0
        %965 = vmatpush1.bf16.msra.mxu0 %v787
        %966 = vmatprep.subr.bf16.mxu0 0
        %967 = vmatpush1.bf16.msra.mxu0 %v788
        %968 = vmatprep.subr.bf16.mxu0 0
        %969 = vmatpush1.bf16.msra.mxu0 %v789
        %970 = vmatprep.subr.bf16.mxu0 0
        %971 = vmatpush1.bf16.msra.mxu0 %v790
        %972 = vmatprep.subr.bf16.mxu0 0
        %973 = vmatpush1.bf16.msra.mxu0 %v791
        %974 = vmatprep.subr.bf16.mxu0 0
        %975 = vmatpush1.bf16.msra.mxu0 %v792
        %976 = vmatprep.subr.bf16.mxu0 0
        %977 = vmatpush1.bf16.msra.mxu0 %v793
        %978 = vmatprep.subr.bf16.mxu0 0
        %979 = vmatpush1.bf16.msra.mxu0 %v794
        %980 = vmatprep.subr.bf16.mxu0 0
        %981 = vmatpush1.bf16.msra.mxu0 %v795
        %982 = vmatprep.subr.bf16.mxu0 0
        %983 = vmatpush1.bf16.msra.mxu0 %v796
        %984 = vmatprep.subr.bf16.mxu0 0
        %985 = vmatpush1.bf16.msra.mxu0 %v797
        %986 = vmatprep.subr.bf16.mxu0 0
        %987 = vmatpush1.bf16.msra.mxu0 %v798
        %988 = vmatprep.subr.bf16.mxu0 0
        %989 = vmatpush1.bf16.msra.mxu0 %v799
        %990 = vmatprep.subr.bf16.mxu0 0
        %991 = vmatpush1.bf16.msra.mxu0 %v800
        %992 = vmatprep.subr.bf16.mxu0 0
        %993 = vmatpush1.bf16.msra.mxu0 %v801
        %994 = vmatprep.subr.bf16.mxu0 0
        %995 = vmatpush1.bf16.msra.mxu0 %v802
        %996 = vmatprep.mubr.bf16.mxu0 %v433
        %997 = vmatmul.mubr.bf16.gmra.mrb[0].mxu0 %v432
        %v998 = vpop.f32.mrb[0].mxu0
        %v999 = vadd.f32 %v902, %v998
        %v1000 = vpop.f32.mrb[0].mxu0
        %v1001 = vpop.f32.mrb[0].mxu0
        %v1002 = vadd.f32 %v905, %v1001
        %v1003 = vpop.f32.mrb[0].mxu0
        %1004 = vmatprep.mubr.bf16.mxu0 %v439
        %1005 = vmatmul.mubr.bf16.gmra.mrb[0].mxu0 %v438
        %v1006 = vpop.f32.mrb[0].mxu0
        %v1007 = vadd.f32 %v910, %v1006
        %v1008 = vpop.f32.mrb[0].mxu0
        %v1009 = vpop.f32.mrb[0].mxu0
        %v1010 = vadd.f32 %v913, %v1009
        %v1011 = vpop.f32.mrb[0].mxu0
        %1012 = vmatprep.mubr.bf16.mxu0 %v445
        %1013 = vmatmul.mubr.bf16.gmra.mrb[0].mxu0 %v444
        %v1014 = vpop.f32.mrb[0].mxu0
        %v1015 = vadd.f32 %v918, %v1014
        %v1016 = vpop.f32.mrb[0].mxu0
        %v1017 = vpop.f32.mrb[0].mxu0
        %v1018 = vadd.f32 %v921, %v1017
        %v1019 = vpop.f32.mrb[0].mxu0
        %1020 = vmatprep.mubr.bf16.mxu0 %v451
        %1021 = vmatmul.mubr.bf16.gmra.mrb[0].mxu0 %v450
        %v1022 = vpop.f32.mrb[0].mxu0
        %v1023 = vadd.f32 %v926, %v1022
        %v1024 = vpop.f32.mrb[0].mxu0
        %v1025 = vpop.f32.mrb[0].mxu0
        %v1026 = vadd.f32 %v929, %v1025
        %v1027 = vpop.f32.mrb[0].mxu0
        %1028 = vmatprep.mubr.bf16.mxu0 %v457
        %1029 = vmatmul.mubr.bf16.gmra.mrb[0].mxu0 %v456
        %v1030 = vpop.f32.mrb[0].mxu0
        %v1031 = vadd.f32 %v934, %v1030
        %v1032 = vpop.f32.mrb[0].mxu0
        %v1033 = vpop.f32.mrb[0].mxu0
        %v1034 = vadd.f32 %v937, %v1033
        %v1035 = vpop.f32.mrb[0].mxu0
        %1036 = vmatprep.mubr.bf16.mxu0 %v463
        %1037 = vmatmul.mubr.bf16.gmra.mrb[0].mxu0 %v462
        %v1038 = vpop.f32.mrb[0].mxu0
        %v1039 = vadd.f32 %v942, %v1038
        %v1040 = vpop.f32.mrb[0].mxu0
        %v1041 = vpop.f32.mrb[0].mxu0
        %v1042 = vadd.f32 %v945, %v1041
        %v1043 = vpop.f32.mrb[0].mxu0
        %1044 = vmatprep.mubr.bf16.mxu0 %v469
        %1045 = vmatmul.mubr.bf16.gmra.mrb[0].mxu0 %v468
        %v1046 = vpop.f32.mrb[0].mxu0
        %v1047 = vadd.f32 %v950, %v1046
        %v1048 = vpop.f32.mrb[0].mxu0
        %v1049 = vpop.f32.mrb[0].mxu0
        %v1050 = vadd.f32 %v953, %v1049
        %v1051 = vpop.f32.mrb[0].mxu0
        %1052 = vmatprep.mubr.bf16.mxu0 %v475
        %1053 = vmatmul.mubr.bf16.gmra.mrb[0].mxu0 %v474
        %v1054 = vpop.f32.mrb[0].mxu0
        %v1055 = vadd.f32 %v958, %v1054
        %v1056 = vpop.f32.mrb[0].mxu0
        %v1057 = vpop.f32.mrb[0].mxu0
        %v1058 = vadd.f32 %v961, %v1057
        %v1059 = vpop.f32.mrb[0].mxu0
        %1060 = vdwg.mxu0
        %1061 = vmatprep.subr.bf16.mxu0 0
        %1062 = vmatpush1.bf16.msra.mxu0 %v803
        %1063 = vmatprep.subr.bf16.mxu0 0
        %1064 = vmatpush1.bf16.msra.mxu0 %v804
        %1065 = vmatprep.subr.bf16.mxu0 0
        %1066 = vmatpush1.bf16.msra.mxu0 %v805
        %1067 = vmatprep.subr.bf16.mxu0 0
        %1068 = vmatpush1.bf16.msra.mxu0 %v806
        %1069 = vmatprep.subr.bf16.mxu0 0
        %1070 = vmatpush1.bf16.msra.mxu0 %v807
        %1071 = vmatprep.subr.bf16.mxu0 0
        %1072 = vmatpush1.bf16.msra.mxu0 %v808
        %1073 = vmatprep.subr.bf16.mxu0 0
        %1074 = vmatpush1.bf16.msra.mxu0 %v809
        %1075 = vmatprep.subr.bf16.mxu0 0
        %1076 = vmatpush1.bf16.msra.mxu0 %v810
        %1077 = vmatprep.subr.bf16.mxu0 0
        %1078 = vmatpush1.bf16.msra.mxu0 %v811
        %1079 = vmatprep.subr.bf16.mxu0 0
        %1080 = vmatpush1.bf16.msra.mxu0 %v812
        %1081 = vmatprep.subr.bf16.mxu0 0
        %1082 = vmatpush1.bf16.msra.mxu0 %v813
        %1083 = vmatprep.subr.bf16.mxu0 0
        %1084 = vmatpush1.bf16.msra.mxu0 %v814
        %1085 = vmatprep.subr.bf16.mxu0 0
        %1086 = vmatpush1.bf16.msra.mxu0 %v815
        %1087 = vmatprep.subr.bf16.mxu0 0
        %1088 = vmatpush1.bf16.msra.mxu0 %v816
        %1089 = vmatprep.subr.bf16.mxu0 0
        %1090 = vmatpush1.bf16.msra.mxu0 %v817
        %1091 = vmatprep.subr.bf16.mxu0 0
        %1092 = vmatpush1.bf16.msra.mxu0 %v818
        %1093 = vmatprep.mubr.bf16.mxu0 %v435
        %1094 = vmatmul.mubr.bf16.gmra.mrb[0].mxu0 %v434
        %v1095 = vpop.f32.mrb[0].mxu0
        %v1096 = vadd.f32 %v999, %v1095
        %v1097 = vpop.f32.mrb[0].mxu0
        %v1098 = vpop.f32.mrb[0].mxu0
        %v1099 = vadd.f32 %v1002, %v1098
        %v1100 = vpop.f32.mrb[0].mxu0
        %1101 = vmatprep.mubr.bf16.mxu0 %v441
        %1102 = vmatmul.mubr.bf16.gmra.mrb[0].mxu0 %v440
        %v1103 = vpop.f32.mrb[0].mxu0
        %v1104 = vadd.f32 %v1007, %v1103
        %v1105 = vpop.f32.mrb[0].mxu0
        %v1106 = vpop.f32.mrb[0].mxu0
        %v1107 = vadd.f32 %v1010, %v1106
        %v1108 = vpop.f32.mrb[0].mxu0
        %1109 = vmatprep.mubr.bf16.mxu0 %v447
        %1110 = vmatmul.mubr.bf16.gmra.mrb[0].mxu0 %v446
        %v1111 = vpop.f32.mrb[0].mxu0
        %v1112 = vadd.f32 %v1015, %v1111
        %v1113 = vpop.f32.mrb[0].mxu0
        %v1114 = vpop.f32.mrb[0].mxu0
        %v1115 = vadd.f32 %v1018, %v1114
        %v1116 = vpop.f32.mrb[0].mxu0
        %1117 = vmatprep.mubr.bf16.mxu0 %v453
        %1118 = vmatmul.mubr.bf16.gmra.mrb[0].mxu0 %v452
        %v1119 = vpop.f32.mrb[0].mxu0
        %v1120 = vadd.f32 %v1023, %v1119
        %v1121 = vpop.f32.mrb[0].mxu0
        %v1122 = vpop.f32.mrb[0].mxu0
        %v1123 = vadd.f32 %v1026, %v1122
        %v1124 = vpop.f32.mrb[0].mxu0
        %1125 = vmatprep.mubr.bf16.mxu0 %v459
        %1126 = vmatmul.mubr.bf16.gmra.mrb[0].mxu0 %v458
        %v1127 = vpop.f32.mrb[0].mxu0
        %v1128 = vadd.f32 %v1031, %v1127
        %v1129 = vpop.f32.mrb[0].mxu0
        %v1130 = vpop.f32.mrb[0].mxu0
        %v1131 = vadd.f32 %v1034, %v1130
        %v1132 = vpop.f32.mrb[0].mxu0
        %1133 = vmatprep.mubr.bf16.mxu0 %v465
        %1134 = vmatmul.mubr.bf16.gmra.mrb[0].mxu0 %v464
        %v1135 = vpop.f32.mrb[0].mxu0
        %v1136 = vadd.f32 %v1039, %v1135
        %v1137 = vpop.f32.mrb[0].mxu0
        %v1138 = vpop.f32.mrb[0].mxu0
        %v1139 = vadd.f32 %v1042, %v1138
        %v1140 = vpop.f32.mrb[0].mxu0
        %1141 = vmatprep.mubr.bf16.mxu0 %v471
        %1142 = vmatmul.mubr.bf16.gmra.mrb[0].mxu0 %v470
        %v1143 = vpop.f32.mrb[0].mxu0
        %v1144 = vadd.f32 %v1047, %v1143
        %v1145 = vpop.f32.mrb[0].mxu0
        %v1146 = vpop.f32.mrb[0].mxu0
        %v1147 = vadd.f32 %v1050, %v1146
        %v1148 = vpop.f32.mrb[0].mxu0
        %1149 = vmatprep.mubr.bf16.mxu0 %v477
        %1150 = vmatmul.mubr.bf16.gmra.mrb[0].mxu0 %v476
        %v1151 = vpop.f32.mrb[0].mxu0
        %v1152 = vadd.f32 %v1055, %v1151
        %v1153 = vpop.f32.mrb[0].mxu0
        %v1154 = vpop.f32.mrb[0].mxu0
        %v1155 = vadd.f32 %v1058, %v1154
        %v1156 = vpop.f32.mrb[0].mxu0
        %1157 = vdwg.mxu0
        %v1158 = vmul.f32 %v1096, 0.01
        %v1159 = vmul.f32 %v1099, 0.01
        %v1160 = vmul.f32 %v1104, 0.01
        %v1161 = vmul.f32 %v1107, 0.01
        %v1162 = vmul.f32 %v1112, 0.01
        %v1163 = vmul.f32 %v1115, 0.01
        %v1164 = vmul.f32 %v1120, 0.01
        %v1165 = vmul.f32 %v1123, 0.01
        %v1166 = vmul.f32 %v1128, 0.01
        %v1167 = vmul.f32 %v1131, 0.01
        %v1168 = vmul.f32 %v1136, 0.01
        %v1169 = vmul.f32 %v1139, 0.01
        %v1170 = vmul.f32 %v1144, 0.01
        %v1171 = vmul.f32 %v1147, 0.01
        %v1172 = vmul.f32 %v1152, 0.01
        %v1173 = vmul.f32 %v1155, 0.01
        %v1174 = vmax.f32 %v1096, %v1158
        %v1175 = vmax.f32 %v1099, %v1159
        %v1176 = vmax.f32 %v1104, %v1160
        %v1177 = vmax.f32 %v1107, %v1161
        %v1178 = vmax.f32 %v1112, %v1162
        %v1179 = vmax.f32 %v1115, %v1163
        %v1180 = vmax.f32 %v1120, %v1164
        %v1181 = vmax.f32 %v1123, %v1165
        %v1182 = vmax.f32 %v1128, %v1166
        %v1183 = vmax.f32 %v1131, %v1167
        %v1184 = vmax.f32 %v1136, %v1168
        %v1185 = vmax.f32 %v1139, %v1169
        %v1186 = vmax.f32 %v1144, %v1170
        %v1187 = vmax.f32 %v1147, %v1171
        %v1188 = vmax.f32 %v1152, %v1172
        %v1189 = vmax.f32 %v1155, %v1173
        %v1190 = vpack.c.bf16 %v1175, %v1174
        %v1191 = vpack.c.bf16 %v1177, %v1176
        %v1192 = vpack.c.bf16 %v1179, %v1178
        %v1193 = vpack.c.bf16 %v1181, %v1180
        %v1194 = vpack.c.bf16 %v1183, %v1182
        %v1195 = vpack.c.bf16 %v1185, %v1184
        %v1196 = vpack.c.bf16 %v1187, %v1186
        %v1197 = vpack.c.bf16 %v1189, %v1188
        %v1198 = vld [vmem:[#allocation6] sm:$0xf]
        %v1199 = vld [vmem:[#allocation6 + $0x4] sm:$0xf]
        %v1200 = vld [vmem:[#allocation6 + $0x8] sm:$0xf]
        %v1201 = vld [vmem:[#allocation6 + $0xc] sm:$0xf]
        %v1202 = vld [vmem:[#allocation6 + $0x10] sm:$0xf]
        %v1203 = vld [vmem:[#allocation6 + $0x14] sm:$0xf]
        %v1204 = vld [vmem:[#allocation6 + $0x18] sm:$0xf]
        %v1205 = vld [vmem:[#allocation6 + $0x1c] sm:$0xf]
        %v1206 = vld [vmem:[#allocation6 + $0x20] sm:$0xf]
        %v1207 = vld [vmem:[#allocation6 + $0x24] sm:$0xf]
        %v1208 = vld [vmem:[#allocation6 + $0x28] sm:$0xf]
        %v1209 = vld [vmem:[#allocation6 + $0x2c] sm:$0xf]
        %v1210 = vld [vmem:[#allocation6 + $0x30] sm:$0xf]
        %v1211 = vld [vmem:[#allocation6 + $0x34] sm:$0xf]
        %v1212 = vld [vmem:[#allocation6 + $0x38] sm:$0xf]
        %v1213 = vld [vmem:[#allocation6 + $0x3c] sm:$0xf]
        %v1214 = vld [vmem:[%s5 + $0x1] sm:$0x1]
        %v1215 = vlaneseq
        %v1216 = vshrl.u32 %v1215, 7
        %v1217 = vsub.s32 0, %v1216
        %v1218 = vrot.slane %v1214, %v1217
        %v1235 = vunpack.c.l.b16 %v1198
        %v1236 = vunpack.c.l.b16 %v1199
        %v1237 = vunpack.c.l.b16 %v1200
        %v1238 = vunpack.c.l.b16 %v1201
        %v1239 = vunpack.c.l.b16 %v1202
        %v1240 = vunpack.c.l.b16 %v1203
        %v1241 = vunpack.c.l.b16 %v1204
        %v1242 = vunpack.c.l.b16 %v1205
        %v1243 = vunpack.c.l.b16 %v1206
        %v1244 = vunpack.c.l.b16 %v1207
        %v1245 = vunpack.c.l.b16 %v1208
        %v1246 = vunpack.c.l.b16 %v1209
        %v1247 = vunpack.c.l.b16 %v1210
        %v1248 = vunpack.c.l.b16 %v1211
        %v1249 = vunpack.c.l.b16 %v1212
        %v1250 = vunpack.c.l.b16 %v1213
        %v1251 = vpack.c.b16 %v1236, %v1235
        %v1252 = vpack.c.b16 %v1238, %v1237
        %v1253 = vpack.c.b16 %v1240, %v1239
        %v1254 = vpack.c.b16 %v1242, %v1241
        %v1255 = vpack.c.b16 %v1244, %v1243
        %v1256 = vpack.c.b16 %v1246, %v1245
        %v1257 = vpack.c.b16 %v1248, %v1247
        %v1258 = vpack.c.b16 %v1250, %v1249
        %1267 = vmatprep.subr.bf16.mxu0 0
        %1268 = vmatpush1.bf16.msra.mxu0 %v1251
        %1269 = vmatprep.subr.bf16.mxu0 0
        %1270 = vmatpush1.bf16.msra.mxu0 %v1252
        %1271 = vmatprep.subr.bf16.mxu0 0
        %1272 = vmatpush1.bf16.msra.mxu0 %v1253
        %1273 = vmatprep.subr.bf16.mxu0 0
        %1274 = vmatpush1.bf16.msra.mxu0 %v1254
        %1275 = vmatprep.subr.bf16.mxu0 0
        %1276 = vmatpush1.bf16.msra.mxu0 %v1255
        %1277 = vmatprep.subr.bf16.mxu0 0
        %1278 = vmatpush1.bf16.msra.mxu0 %v1256
        %1279 = vmatprep.subr.bf16.mxu0 0
        %1280 = vmatpush1.bf16.msra.mxu0 %v1257
        %1281 = vmatprep.subr.bf16.mxu0 0
        %1282 = vmatpush1.bf16.msra.mxu0 %v1258
        %1283 = vmatprep.subr.bf16.mxu0 0
        %1284 = vmatpush1.bf16.msra.mxu0 0
        %1285 = vmatprep.subr.bf16.mxu0 0
        %1286 = vmatpush1.bf16.msra.mxu0 0
        %1287 = vmatprep.subr.bf16.mxu0 0
        %1288 = vmatpush1.bf16.msra.mxu0 0
        %1289 = vmatprep.subr.bf16.mxu0 0
        %1290 = vmatpush1.bf16.msra.mxu0 0
        %1291 = vmatprep.subr.bf16.mxu0 0
        %1292 = vmatpush1.bf16.msra.mxu0 0
        %1293 = vmatprep.subr.bf16.mxu0 0
        %1294 = vmatpush1.bf16.msra.mxu0 0
        %1295 = vmatprep.subr.bf16.mxu0 0
        %1296 = vmatpush1.bf16.msra.mxu0 0
        %1297 = vmatprep.subr.bf16.mxu0 0
        %1298 = vmatpush1.bf16.msra.mxu0 0
        %1299 = vmatprep.mubr.bf16.mxu0 0
        %1300 = vmatmul.mubr.bf16.gmra.mrb[0].mxu0 %v1190
        %v1301 = vpop.f32.mrb[0].mxu0
        %v1302 = vadd.f32 %v1218, %v1301
        %v1303 = vpop.f32.mrb[0].mxu0
        %v1304 = vpop.f32.mrb[0].mxu0
        %v1305 = vadd.f32 %v1218, %v1304
        %v1306 = vpop.f32.mrb[0].mxu0
        %1307 = vmatprep.mubr.bf16.mxu0 0
        %1308 = vmatmul.mubr.bf16.gmra.mrb[0].mxu0 %v1191
        %v1309 = vpop.f32.mrb[0].mxu0
        %v1310 = vadd.f32 %v1218, %v1309
        %v1311 = vpop.f32.mrb[0].mxu0
        %v1312 = vpop.f32.mrb[0].mxu0
        %v1313 = vadd.f32 %v1218, %v1312
        %v1314 = vpop.f32.mrb[0].mxu0
        %1315 = vmatprep.mubr.bf16.mxu0 0
        %1316 = vmatmul.mubr.bf16.gmra.mrb[0].mxu0 %v1192
        %v1317 = vpop.f32.mrb[0].mxu0
        %v1318 = vadd.f32 %v1218, %v1317
        %v1319 = vpop.f32.mrb[0].mxu0
        %v1320 = vpop.f32.mrb[0].mxu0
        %v1321 = vadd.f32 %v1218, %v1320
        %v1322 = vpop.f32.mrb[0].mxu0
        %1323 = vmatprep.mubr.bf16.mxu0 0
        %1324 = vmatmul.mubr.bf16.gmra.mrb[0].mxu0 %v1193
        %v1325 = vpop.f32.mrb[0].mxu0
        %v1326 = vadd.f32 %v1218, %v1325
        %v1327 = vpop.f32.mrb[0].mxu0
        %v1328 = vpop.f32.mrb[0].mxu0
        %v1329 = vadd.f32 %v1218, %v1328
        %v1330 = vpop.f32.mrb[0].mxu0
        %1331 = vmatprep.mubr.bf16.mxu0 0
        %1332 = vmatmul.mubr.bf16.gmra.mrb[0].mxu0 %v1194
        %v1333 = vpop.f32.mrb[0].mxu0
        %v1334 = vadd.f32 %v1218, %v1333
        %v1335 = vpop.f32.mrb[0].mxu0
        %v1336 = vpop.f32.mrb[0].mxu0
        %v1337 = vadd.f32 %v1218, %v1336
        %v1338 = vpop.f32.mrb[0].mxu0
        %1339 = vmatprep.mubr.bf16.mxu0 0
        %1340 = vmatmul.mubr.bf16.gmra.mrb[0].mxu0 %v1195
        %v1341 = vpop.f32.mrb[0].mxu0
        %v1342 = vadd.f32 %v1218, %v1341
        %v1343 = vpop.f32.mrb[0].mxu0
        %v1344 = vpop.f32.mrb[0].mxu0
        %v1345 = vadd.f32 %v1218, %v1344
        %v1346 = vpop.f32.mrb[0].mxu0
        %1347 = vmatprep.mubr.bf16.mxu0 0
        %1348 = vmatmul.mubr.bf16.gmra.mrb[0].mxu0 %v1196
        %v1349 = vpop.f32.mrb[0].mxu0
        %v1350 = vadd.f32 %v1218, %v1349
        %v1351 = vpop.f32.mrb[0].mxu0
        %v1352 = vpop.f32.mrb[0].mxu0
        %v1353 = vadd.f32 %v1218, %v1352
        %v1354 = vpop.f32.mrb[0].mxu0
        %1355 = vmatprep.mubr.bf16.mxu0 0
        %1356 = vmatmul.mubr.bf16.gmra.mrb[0].mxu0 %v1197
        %v1357 = vpop.f32.mrb[0].mxu0
        %v1358 = vadd.f32 %v1218, %v1357
        %v1359 = vpop.f32.mrb[0].mxu0
        %v1360 = vpop.f32.mrb[0].mxu0
        %v1361 = vadd.f32 %v1218, %v1360
        %v1362 = vpop.f32.mrb[0].mxu0
        %1363 = vdwg.mxu0
        %v1364 = vmul.f32 %v1302, 0.01
        %v1365 = vmul.f32 %v1305, 0.01
        %v1366 = vmul.f32 %v1310, 0.01
        %v1367 = vmul.f32 %v1313, 0.01
        %v1368 = vmul.f32 %v1318, 0.01
        %v1369 = vmul.f32 %v1321, 0.01
        %v1370 = vmul.f32 %v1326, 0.01
        %v1371 = vmul.f32 %v1329, 0.01
        %v1372 = vmul.f32 %v1334, 0.01
        %v1373 = vmul.f32 %v1337, 0.01
        %v1374 = vmul.f32 %v1342, 0.01
        %v1375 = vmul.f32 %v1345, 0.01
        %v1376 = vmul.f32 %v1350, 0.01
        %v1377 = vmul.f32 %v1353, 0.01
        %v1378 = vmul.f32 %v1358, 0.01
        %v1379 = vmul.f32 %v1361, 0.01
        %v1380 = vmax.f32 %v1302, %v1364
        %v1381 = vmax.f32 %v1305, %v1365
        %v1382 = vmax.f32 %v1310, %v1366
        %v1383 = vmax.f32 %v1313, %v1367
        %v1384 = vmax.f32 %v1318, %v1368
        %v1385 = vmax.f32 %v1321, %v1369
        %v1386 = vmax.f32 %v1326, %v1370
        %v1387 = vmax.f32 %v1329, %v1371
        %v1388 = vmax.f32 %v1334, %v1372
        %v1389 = vmax.f32 %v1337, %v1373
        %v1390 = vmax.f32 %v1342, %v1374
        %v1391 = vmax.f32 %v1345, %v1375
        %v1392 = vmax.f32 %v1350, %v1376
        %v1393 = vmax.f32 %v1353, %v1377
        %v1394 = vmax.f32 %v1358, %v1378
        %v1395 = vmax.f32 %v1361, %v1379
        %v1396 = vpack.c.bf16 %v1381, %v1380
        %v1397 = vpack.c.bf16 %v1383, %v1382
        %v1398 = vpack.c.bf16 %v1385, %v1384
        %v1399 = vpack.c.bf16 %v1387, %v1386
        %v1400 = vpack.c.bf16 %v1389, %v1388
        %v1401 = vpack.c.bf16 %v1391, %v1390
        %v1402 = vpack.c.bf16 %v1393, %v1392
        %v1403 = vpack.c.bf16 %v1395, %v1394
        %v1404 = vld [vmem:[#allocation7] sm:$0xf]
        %v1405 = vld [vmem:[#allocation7 + $0x4] sm:$0xf]
        %v1406 = vld [vmem:[#allocation7 + $0x8] sm:$0xf]
        %v1407 = vld [vmem:[#allocation7 + $0xc] sm:$0xf]
        %v1408 = vld [vmem:[#allocation7 + $0x10] sm:$0xf]
        %v1409 = vld [vmem:[#allocation7 + $0x14] sm:$0xf]
        %v1410 = vld [vmem:[#allocation7 + $0x18] sm:$0xf]
        %v1411 = vld [vmem:[#allocation7 + $0x1c] sm:$0xf]
        %v1412 = vld [vmem:[#allocation7 + $0x20] sm:$0xf]
        %v1413 = vld [vmem:[#allocation7 + $0x24] sm:$0xf]
        %v1414 = vld [vmem:[#allocation7 + $0x28] sm:$0xf]
        %v1415 = vld [vmem:[#allocation7 + $0x2c] sm:$0xf]
        %v1416 = vld [vmem:[#allocation7 + $0x30] sm:$0xf]
        %v1417 = vld [vmem:[#allocation7 + $0x34] sm:$0xf]
        %v1418 = vld [vmem:[#allocation7 + $0x38] sm:$0xf]
        %v1419 = vld [vmem:[#allocation7 + $0x3c] sm:$0xf]
        %v1420 = vld [vmem:[%s5 + $0x2] sm:$0x1]
        %v1421 = vlaneseq
        %v1422 = vshrl.u32 %v1421, 7
        %v1423 = vsub.s32 0, %v1422
        %v1424 = vrot.slane %v1420, %v1423
        %v1441 = vunpack.c.l.b16 %v1404
        %v1442 = vunpack.c.l.b16 %v1405
        %v1443 = vunpack.c.l.b16 %v1406
        %v1444 = vunpack.c.l.b16 %v1407
        %v1445 = vunpack.c.l.b16 %v1408
        %v1446 = vunpack.c.l.b16 %v1409
        %v1447 = vunpack.c.l.b16 %v1410
        %v1448 = vunpack.c.l.b16 %v1411
        %v1449 = vunpack.c.l.b16 %v1412
        %v1450 = vunpack.c.l.b16 %v1413
        %v1451 = vunpack.c.l.b16 %v1414
        %v1452 = vunpack.c.l.b16 %v1415
        %v1453 = vunpack.c.l.b16 %v1416
        %v1454 = vunpack.c.l.b16 %v1417
        %v1455 = vunpack.c.l.b16 %v1418
        %v1456 = vunpack.c.l.b16 %v1419
        %v1457 = vpack.c.b16 %v1442, %v1441
        %v1458 = vpack.c.b16 %v1444, %v1443
        %v1459 = vpack.c.b16 %v1446, %v1445
        %v1460 = vpack.c.b16 %v1448, %v1447
        %v1461 = vpack.c.b16 %v1450, %v1449
        %v1462 = vpack.c.b16 %v1452, %v1451
        %v1463 = vpack.c.b16 %v1454, %v1453
        %v1464 = vpack.c.b16 %v1456, %v1455
        %1473 = vmatprep.subr.bf16.mxu0 0
        %1474 = vmatpush1.bf16.msra.mxu0 %v1457
        %1475 = vmatprep.subr.bf16.mxu0 0
        %1476 = vmatpush1.bf16.msra.mxu0 %v1458
        %1477 = vmatprep.subr.bf16.mxu0 0
        %1478 = vmatpush1.bf16.msra.mxu0 %v1459
        %1479 = vmatprep.subr.bf16.mxu0 0
        %1480 = vmatpush1.bf16.msra.mxu0 %v1460
        %1481 = vmatprep.subr.bf16.mxu0 0
        %1482 = vmatpush1.bf16.msra.mxu0 %v1461
        %1483 = vmatprep.subr.bf16.mxu0 0
        %1484 = vmatpush1.bf16.msra.mxu0 %v1462
        %1485 = vmatprep.subr.bf16.mxu0 0
        %1486 = vmatpush1.bf16.msra.mxu0 %v1463
        %1487 = vmatprep.subr.bf16.mxu0 0
        %1488 = vmatpush1.bf16.msra.mxu0 %v1464
        %1489 = vmatprep.subr.bf16.mxu0 0
        %1490 = vmatpush1.bf16.msra.mxu0 0
        %1491 = vmatprep.subr.bf16.mxu0 0
        %1492 = vmatpush1.bf16.msra.mxu0 0
        %1493 = vmatprep.subr.bf16.mxu0 0
        %1494 = vmatpush1.bf16.msra.mxu0 0
        %1495 = vmatprep.subr.bf16.mxu0 0
        %1496 = vmatpush1.bf16.msra.mxu0 0
        %1497 = vmatprep.subr.bf16.mxu0 0
        %1498 = vmatpush1.bf16.msra.mxu0 0
        %1499 = vmatprep.subr.bf16.mxu0 0
        %1500 = vmatpush1.bf16.msra.mxu0 0
        %1501 = vmatprep.subr.bf16.mxu0 0
        %1502 = vmatpush1.bf16.msra.mxu0 0
        %1503 = vmatprep.subr.bf16.mxu0 0
        %1504 = vmatpush1.bf16.msra.mxu0 0
        %1505 = vmatprep.mubr.bf16.mxu0 0
        %1506 = vmatmul.mubr.bf16.gmra.mrb[0].mxu0 %v1396
        %v1507 = vpop.f32.mrb[0].mxu0
        %v1508 = vadd.f32 %v1424, %v1507
        %v1509 = vpop.f32.mrb[0].mxu0
        %v1510 = vpop.f32.mrb[0].mxu0
        %v1511 = vadd.f32 %v1424, %v1510
        %v1512 = vpop.f32.mrb[0].mxu0
        %1513 = vmatprep.mubr.bf16.mxu0 0
        %1514 = vmatmul.mubr.bf16.gmra.mrb[0].mxu0 %v1397
        %v1515 = vpop.f32.mrb[0].mxu0
        %v1516 = vadd.f32 %v1424, %v1515
        %v1517 = vpop.f32.mrb[0].mxu0
        %v1518 = vpop.f32.mrb[0].mxu0
        %v1519 = vadd.f32 %v1424, %v1518
        %v1520 = vpop.f32.mrb[0].mxu0
        %1521 = vmatprep.mubr.bf16.mxu0 0
        %1522 = vmatmul.mubr.bf16.gmra.mrb[0].mxu0 %v1398
        %v1523 = vpop.f32.mrb[0].mxu0
        %v1524 = vadd.f32 %v1424, %v1523
        %v1525 = vpop.f32.mrb[0].mxu0
        %v1526 = vpop.f32.mrb[0].mxu0
        %v1527 = vadd.f32 %v1424, %v1526
        %v1528 = vpop.f32.mrb[0].mxu0
        %1529 = vmatprep.mubr.bf16.mxu0 0
        %1530 = vmatmul.mubr.bf16.gmra.mrb[0].mxu0 %v1399
        %v1531 = vpop.f32.mrb[0].mxu0
        %v1532 = vadd.f32 %v1424, %v1531
        %v1533 = vpop.f32.mrb[0].mxu0
        %v1534 = vpop.f32.mrb[0].mxu0
        %v1535 = vadd.f32 %v1424, %v1534
        %v1536 = vpop.f32.mrb[0].mxu0
        %1537 = vmatprep.mubr.bf16.mxu0 0
        %1538 = vmatmul.mubr.bf16.gmra.mrb[0].mxu0 %v1400
        %v1539 = vpop.f32.mrb[0].mxu0
        %v1540 = vadd.f32 %v1424, %v1539
        %v1541 = vpop.f32.mrb[0].mxu0
        %v1542 = vpop.f32.mrb[0].mxu0
        %v1543 = vadd.f32 %v1424, %v1542
        %v1544 = vpop.f32.mrb[0].mxu0
        %1545 = vmatprep.mubr.bf16.mxu0 0
        %1546 = vmatmul.mubr.bf16.gmra.mrb[0].mxu0 %v1401
        %v1547 = vpop.f32.mrb[0].mxu0
        %v1548 = vadd.f32 %v1424, %v1547
        %v1549 = vpop.f32.mrb[0].mxu0
        %v1550 = vpop.f32.mrb[0].mxu0
        %v1551 = vadd.f32 %v1424, %v1550
        %v1552 = vpop.f32.mrb[0].mxu0
        %1553 = vmatprep.mubr.bf16.mxu0 0
        %1554 = vmatmul.mubr.bf16.gmra.mrb[0].mxu0 %v1402
        %v1555 = vpop.f32.mrb[0].mxu0
        %v1556 = vadd.f32 %v1424, %v1555
        %v1557 = vpop.f32.mrb[0].mxu0
        %v1558 = vpop.f32.mrb[0].mxu0
        %v1559 = vadd.f32 %v1424, %v1558
        %v1560 = vpop.f32.mrb[0].mxu0
        %1561 = vmatprep.mubr.bf16.mxu0 0
        %1562 = vmatmul.mubr.bf16.gmra.mrb[0].mxu0 %v1403
        %v1563 = vpop.f32.mrb[0].mxu0
        %v1564 = vadd.f32 %v1424, %v1563
        %v1565 = vpop.f32.mrb[0].mxu0
        %v1566 = vpop.f32.mrb[0].mxu0
        %v1567 = vadd.f32 %v1424, %v1566
        %v1568 = vpop.f32.mrb[0].mxu0
        %1569 = vdwg.mxu0
        %v1570 = vmul.f32 %v1508, 0.01
        %v1571 = vmul.f32 %v1511, 0.01
        %v1572 = vmul.f32 %v1516, 0.01
        %v1573 = vmul.f32 %v1519, 0.01
        %v1574 = vmul.f32 %v1524, 0.01
        %v1575 = vmul.f32 %v1527, 0.01
        %v1576 = vmul.f32 %v1532, 0.01
        %v1577 = vmul.f32 %v1535, 0.01
        %v1578 = vmul.f32 %v1540, 0.01
        %v1579 = vmul.f32 %v1543, 0.01
        %v1580 = vmul.f32 %v1548, 0.01
        %v1581 = vmul.f32 %v1551, 0.01
        %v1582 = vmul.f32 %v1556, 0.01
        %v1583 = vmul.f32 %v1559, 0.01
        %v1584 = vmul.f32 %v1564, 0.01
        %v1585 = vmul.f32 %v1567, 0.01
        %v1586 = vmax.f32 %v1508, %v1570
        %v1587 = vmax.f32 %v1511, %v1571
        %v1588 = vmax.f32 %v1516, %v1572
        %v1589 = vmax.f32 %v1519, %v1573
        %v1590 = vmax.f32 %v1524, %v1574
        %v1591 = vmax.f32 %v1527, %v1575
        %v1592 = vmax.f32 %v1532, %v1576
        %v1593 = vmax.f32 %v1535, %v1577
        %v1594 = vmax.f32 %v1540, %v1578
        %v1595 = vmax.f32 %v1543, %v1579
        %v1596 = vmax.f32 %v1548, %v1580
        %v1597 = vmax.f32 %v1551, %v1581
        %v1598 = vmax.f32 %v1556, %v1582
        %v1599 = vmax.f32 %v1559, %v1583
        %v1600 = vmax.f32 %v1564, %v1584
        %v1601 = vmax.f32 %v1567, %v1585
        %v1602 = vpack.c.bf16 %v1587, %v1586
        %v1603 = vpack.c.bf16 %v1589, %v1588
        %v1604 = vpack.c.bf16 %v1591, %v1590
        %v1605 = vpack.c.bf16 %v1593, %v1592
        %v1606 = vpack.c.bf16 %v1595, %v1594
        %v1607 = vpack.c.bf16 %v1597, %v1596
        %v1608 = vpack.c.bf16 %v1599, %v1598
        %v1609 = vpack.c.bf16 %v1601, %v1600
        %v1610 = vld [vmem:[#allocation9] sm:$0xf]
        %v1611 = vld [vmem:[#allocation9 + $0x4] sm:$0xf]
        %v1612 = vld [vmem:[#allocation9 + $0x8] sm:$0xf]
        %v1613 = vld [vmem:[#allocation9 + $0xc] sm:$0xf]
        %v1614 = vld [vmem:[#allocation9 + $0x10] sm:$0xf]
        %v1615 = vld [vmem:[#allocation9 + $0x14] sm:$0xf]
        %v1616 = vld [vmem:[#allocation9 + $0x18] sm:$0xf]
        %v1617 = vld [vmem:[#allocation9 + $0x1c] sm:$0xf]
        %v1618 = vld [vmem:[#allocation9 + $0x20] sm:$0xf]
        %v1619 = vld [vmem:[#allocation9 + $0x24] sm:$0xf]
        %v1620 = vld [vmem:[#allocation9 + $0x28] sm:$0xf]
        %v1621 = vld [vmem:[#allocation9 + $0x2c] sm:$0xf]
        %v1622 = vld [vmem:[#allocation9 + $0x30] sm:$0xf]
        %v1623 = vld [vmem:[#allocation9 + $0x34] sm:$0xf]
        %v1624 = vld [vmem:[#allocation9 + $0x38] sm:$0xf]
        %v1625 = vld [vmem:[#allocation9 + $0x3c] sm:$0xf]
        %v1626 = vld [vmem:[%s5 + $0x3] sm:$0x1]
        %v1627 = vlaneseq
        %v1628 = vshrl.u32 %v1627, 7
        %v1629 = vsub.s32 0, %v1628
        %v1630 = vrot.slane %v1626, %v1629
        %v1647 = vunpack.c.l.b16 %v1610
        %v1648 = vunpack.c.l.b16 %v1611
        %v1649 = vunpack.c.l.b16 %v1612
        %v1650 = vunpack.c.l.b16 %v1613
        %v1651 = vunpack.c.l.b16 %v1614
        %v1652 = vunpack.c.l.b16 %v1615
        %v1653 = vunpack.c.l.b16 %v1616
        %v1654 = vunpack.c.l.b16 %v1617
        %v1655 = vunpack.c.l.b16 %v1618
        %v1656 = vunpack.c.l.b16 %v1619
        %v1657 = vunpack.c.l.b16 %v1620
        %v1658 = vunpack.c.l.b16 %v1621
        %v1659 = vunpack.c.l.b16 %v1622
        %v1660 = vunpack.c.l.b16 %v1623
        %v1661 = vunpack.c.l.b16 %v1624
        %v1662 = vunpack.c.l.b16 %v1625
        %v1663 = vpack.c.b16 %v1648, %v1647
        %v1664 = vpack.c.b16 %v1650, %v1649
        %v1665 = vpack.c.b16 %v1652, %v1651
        %v1666 = vpack.c.b16 %v1654, %v1653
        %v1667 = vpack.c.b16 %v1656, %v1655
        %v1668 = vpack.c.b16 %v1658, %v1657
        %v1669 = vpack.c.b16 %v1660, %v1659
        %v1670 = vpack.c.b16 %v1662, %v1661
        %1679 = vmatprep.subr.bf16.mxu0 0
        %1680 = vmatpush1.bf16.msra.mxu0 %v1663
        %1681 = vmatprep.subr.bf16.mxu0 0
        %1682 = vmatpush1.bf16.msra.mxu0 %v1664
        %1683 = vmatprep.subr.bf16.mxu0 0
        %1684 = vmatpush1.bf16.msra.mxu0 %v1665
        %1685 = vmatprep.subr.bf16.mxu0 0
        %1686 = vmatpush1.bf16.msra.mxu0 %v1666
        %1687 = vmatprep.subr.bf16.mxu0 0
        %1688 = vmatpush1.bf16.msra.mxu0 %v1667
        %1689 = vmatprep.subr.bf16.mxu0 0
        %1690 = vmatpush1.bf16.msra.mxu0 %v1668
        %1691 = vmatprep.subr.bf16.mxu0 0
        %1692 = vmatpush1.bf16.msra.mxu0 %v1669
        %1693 = vmatprep.subr.bf16.mxu0 0
        %1694 = vmatpush1.bf16.msra.mxu0 %v1670
        %1695 = vmatprep.subr.bf16.mxu0 0
        %1696 = vmatpush1.bf16.msra.mxu0 0
        %1697 = vmatprep.subr.bf16.mxu0 0
        %1698 = vmatpush1.bf16.msra.mxu0 0
        %1699 = vmatprep.subr.bf16.mxu0 0
        %1700 = vmatpush1.bf16.msra.mxu0 0
        %1701 = vmatprep.subr.bf16.mxu0 0
        %1702 = vmatpush1.bf16.msra.mxu0 0
        %1703 = vmatprep.subr.bf16.mxu0 0
        %1704 = vmatpush1.bf16.msra.mxu0 0
        %1705 = vmatprep.subr.bf16.mxu0 0
        %1706 = vmatpush1.bf16.msra.mxu0 0
        %1707 = vmatprep.subr.bf16.mxu0 0
        %1708 = vmatpush1.bf16.msra.mxu0 0
        %1709 = vmatprep.subr.bf16.mxu0 0
        %1710 = vmatpush1.bf16.msra.mxu0 0
        %1711 = vmatprep.mubr.bf16.mxu0 0
        %1712 = vmatmul.mubr.bf16.gmra.mrb[0].mxu0 %v1602
        %v1713 = vpop.f32.mrb[0].mxu0
        %v1714 = vadd.f32 %v1630, %v1713
        %v1715 = vpop.f32.mrb[0].mxu0
        %v1716 = vpop.f32.mrb[0].mxu0
        %v1717 = vadd.f32 %v1630, %v1716
        %v1718 = vpop.f32.mrb[0].mxu0
        %1719 = vmatprep.mubr.bf16.mxu0 0
        %1720 = vmatmul.mubr.bf16.gmra.mrb[0].mxu0 %v1603
        %v1721 = vpop.f32.mrb[0].mxu0
        %v1722 = vadd.f32 %v1630, %v1721
        %v1723 = vpop.f32.mrb[0].mxu0
        %v1724 = vpop.f32.mrb[0].mxu0
        %v1725 = vadd.f32 %v1630, %v1724
        %v1726 = vpop.f32.mrb[0].mxu0
        %1727 = vmatprep.mubr.bf16.mxu0 0
        %1728 = vmatmul.mubr.bf16.gmra.mrb[0].mxu0 %v1604
        %v1729 = vpop.f32.mrb[0].mxu0
        %v1730 = vadd.f32 %v1630, %v1729
        %v1731 = vpop.f32.mrb[0].mxu0
        %v1732 = vpop.f32.mrb[0].mxu0
        %v1733 = vadd.f32 %v1630, %v1732
        %v1734 = vpop.f32.mrb[0].mxu0
        %1735 = vmatprep.mubr.bf16.mxu0 0
        %1736 = vmatmul.mubr.bf16.gmra.mrb[0].mxu0 %v1605
        %v1737 = vpop.f32.mrb[0].mxu0
        %v1738 = vadd.f32 %v1630, %v1737
        %v1739 = vpop.f32.mrb[0].mxu0
        %v1740 = vpop.f32.mrb[0].mxu0
        %v1741 = vadd.f32 %v1630, %v1740
        %v1742 = vpop.f32.mrb[0].mxu0
        %1743 = vmatprep.mubr.bf16.mxu0 0
        %1744 = vmatmul.mubr.bf16.gmra.mrb[0].mxu0 %v1606
        %v1745 = vpop.f32.mrb[0].mxu0
        %v1746 = vadd.f32 %v1630, %v1745
        %v1747 = vpop.f32.mrb[0].mxu0
        %v1748 = vpop.f32.mrb[0].mxu0
        %v1749 = vadd.f32 %v1630, %v1748
        %v1750 = vpop.f32.mrb[0].mxu0
        %1751 = vmatprep.mubr.bf16.mxu0 0
        %1752 = vmatmul.mubr.bf16.gmra.mrb[0].mxu0 %v1607
        %v1753 = vpop.f32.mrb[0].mxu0
        %v1754 = vadd.f32 %v1630, %v1753
        %v1755 = vpop.f32.mrb[0].mxu0
        %v1756 = vpop.f32.mrb[0].mxu0
        %v1757 = vadd.f32 %v1630, %v1756
        %v1758 = vpop.f32.mrb[0].mxu0
        %1759 = vmatprep.mubr.bf16.mxu0 0
        %1760 = vmatmul.mubr.bf16.gmra.mrb[0].mxu0 %v1608
        %v1761 = vpop.f32.mrb[0].mxu0
        %v1762 = vadd.f32 %v1630, %v1761
        %v1763 = vpop.f32.mrb[0].mxu0
        %v1764 = vpop.f32.mrb[0].mxu0
        %v1765 = vadd.f32 %v1630, %v1764
        %v1766 = vpop.f32.mrb[0].mxu0
        %1767 = vmatprep.mubr.bf16.mxu0 0
        %1768 = vmatmul.mubr.bf16.gmra.mrb[0].mxu0 %v1609
        %v1769 = vpop.f32.mrb[0].mxu0
        %v1770 = vadd.f32 %v1630, %v1769
        %v1771 = vpop.f32.mrb[0].mxu0
        %v1772 = vpop.f32.mrb[0].mxu0
        %v1773 = vadd.f32 %v1630, %v1772
        %v1774 = vpop.f32.mrb[0].mxu0
        %1775 = vdwg.mxu0
        %v1776 = vmax.f32 %v1714, 0.0
        %v1777 = vmax.f32 %v1717, 0.0
        %v1778 = vmax.f32 %v1722, 0.0
        %v1779 = vmax.f32 %v1725, 0.0
        %v1780 = vmax.f32 %v1730, 0.0
        %v1781 = vmax.f32 %v1733, 0.0
        %v1782 = vmax.f32 %v1738, 0.0
        %v1783 = vmax.f32 %v1741, 0.0
        %v1784 = vmax.f32 %v1746, 0.0
        %v1785 = vmax.f32 %v1749, 0.0
        %v1786 = vmax.f32 %v1754, 0.0
        %v1787 = vmax.f32 %v1757, 0.0
        %v1788 = vmax.f32 %v1762, 0.0
        %v1789 = vmax.f32 %v1765, 0.0
        %v1790 = vmax.f32 %v1770, 0.0
        %v1791 = vmax.f32 %v1773, 0.0
        %v1792 = vmin.f32 %v1776, 10.0
        %v1793 = vmin.f32 %v1777, 10.0
        %v1794 = vmin.f32 %v1778, 10.0
        %v1795 = vmin.f32 %v1779, 10.0
        %v1796 = vmin.f32 %v1780, 10.0
        %v1797 = vmin.f32 %v1781, 10.0
        %v1798 = vmin.f32 %v1782, 10.0
        %v1799 = vmin.f32 %v1783, 10.0
        %v1800 = vmin.f32 %v1784, 10.0
        %v1801 = vmin.f32 %v1785, 10.0
        %v1802 = vmin.f32 %v1786, 10.0
        %v1803 = vmin.f32 %v1787, 10.0
        %v1804 = vmin.f32 %v1788, 10.0
        %v1805 = vmin.f32 %v1789, 10.0
        %v1806 = vmin.f32 %v1790, 10.0
        %v1807 = vmin.f32 %v1791, 10.0
        %vm1808 = vcmask 7168
        %1809 = vst.msk [vmem:[%s331] sm:$0xff] %vm1808, %v1792
        %1810 = vst.msk [vmem:[%s331 + $0x8] sm:$0xff] %vm1808, %v1793
        %1811 = vst.msk [vmem:[%s331 + $0x10] sm:$0xff] %vm1808, %v1794
        %1812 = vst.msk [vmem:[%s331 + $0x18] sm:$0xff] %vm1808, %v1795
        %1813 = vst.msk [vmem:[%s331 + $0x20] sm:$0xff] %vm1808, %v1796
        %1814 = vst.msk [vmem:[%s331 + $0x28] sm:$0xff] %vm1808, %v1797
        %1815 = vst.msk [vmem:[%s331 + $0x30] sm:$0xff] %vm1808, %v1798
        %1816 = vst.msk [vmem:[%s331 + $0x38] sm:$0xff] %vm1808, %v1799
        %1817 = vst.msk [vmem:[%s331 + $0x40] sm:$0xff] %vm1808, %v1800
        %1818 = vst.msk [vmem:[%s331 + $0x48] sm:$0xff] %vm1808, %v1801
        %1819 = vst.msk [vmem:[%s331 + $0x50] sm:$0xff] %vm1808, %v1802
        %1820 = vst.msk [vmem:[%s331 + $0x58] sm:$0xff] %vm1808, %v1803
        %1821 = vst.msk [vmem:[%s331 + $0x60] sm:$0xff] %vm1808, %v1804
        %1822 = vst.msk [vmem:[%s331 + $0x68] sm:$0xff] %vm1808, %v1805
        %1823 = vst.msk [vmem:[%s331 + $0x70] sm:$0xff] %vm1808, %v1806
        %1824 = vst.msk [vmem:[%s331 + $0x78] sm:$0xff] %vm1808, %v1807
        %s1825 = smul.u32 16, %s22
        %p1826 = scmp.lt.s32.totalorder %s1825, 31
        %s1827 = scalar_select %p1826, %s1825, 31
        %s1828 = smul.addr %s1827, 8
        %s1829 = scalar_lea.vmem %s6, %s1828
        // Predicated region
        $region65: #{tpu_custom_call.1} parent=43 // pred_check
          %p1830 = pneg %p171
        $region66: #{tpu_custom_call.1} parent=43 // pred_check_branch
          %1832 = sbr.rel (%p1830) target = $region68
        $region67: #{tpu_custom_call.1} parent=43 // pred_region
          %s1833 = smul.u32 16, %s22
        $region68: #{tpu_custom_call.1} parent=43 // pred_fallthru
          _
      $region44: #{tpu_custom_call.1} parent=5 // pred_fallthru
        _
      %p1834 = scmp.le.s32.totalorder 2, %s17
      // Predicated region
      $region69: #{tpu_custom_call.1} parent=5 // pred_check
        %p1835 = pneg %p1834
      $region70: #{tpu_custom_call.1} parent=5 // pred_check_branch
        %1837 = sbr.rel (%p1835) target = $region72
      $region71: #{tpu_custom_call.1} parent=5 // pred_region
        %s1838 = ssub.s32 %s17, 2
        // Predicated region
        $region73: #{tpu_custom_call.1} parent=71 // pred_check
          %p1839 = pneg %p177
        $region74: #{tpu_custom_call.1} parent=71 // pred_check_branch
          %1841 = sbr.rel (%p1839) target = $region76
        $region75: #{tpu_custom_call.1} parent=71 // pred_region
          %s1842 = smul.u32 16, %s23
          %p1843 = scmp.lt.s32.totalorder %s1842, 31
          %s1844 = scalar_select %p1843, %s1842, 31
          %s1845 = smul.addr %s1844, 8
          %s1846 = scalar_lea.vmem %s6, %s1845
        $region76: #{tpu_custom_call.1} parent=71 // pred_fallthru
          _
      $region72: #{tpu_custom_call.1} parent=5 // pred_fallthru
        _
    $region6: #{tpu_custom_call.1} parent=1 // loop_footer
      %s21 = sadd.s32 1, %s17
    $region7: #{tpu_custom_call.1} parent=1 // loop_footer_branch
      %16 = sbr.rel target = $region3
    $region8: #{tpu_custom_call.1} parent=1 // loop_exit
      _
    %1847 = vsyncpa [#allocation3], 1
    %s1848 = scalar_lea.sflag [#allocation3], 1
    %1849 = vsyncpa %s1848, 1
    %1850 = vsyncpa [#allocation5], 1
    %1851 = vsyncpa [#allocation8], 1

</llo_original>
